<compile_context>
chip_gen: v7x
topology: tpu7x:2x2x1
jax: 0.10.0
libtpu: 0.0.40
codegen_flags: <defaults>
</compile_context>

<pallas_src>
import jax
import jax.numpy as jnp
from jax.experimental import pallas as pl
from jax.experimental.pallas import tpu as pltpu

SZ = 100                     # GENUINE(sz=100) default
ENC_DIM = 512                # encoder_fs.flatten(1) -> 512 (implied by fc input dim)
BOX_DIM = 18 * SZ            # box_fs: (B, 3*sz, 6) -> flatten -> 1800
IN_DIM = ENC_DIM + BOX_DIM   # 2312
HID = 100
HID_PAD = 128                # lane-padded hidden width
OUT_PAD = 128                # lane-dense output width


def _round_up(n, m):
    return ((n + m - 1) // m) * m


# --------------------------------------------------------------------------
# Pallas kernel: fused  (x_enc@W1e + x_box@W1b + b1) -> ReLU -> (·w2 row, reduce) + b2
# --------------------------------------------------------------------------
def fc_head_kernel(x_enc_ref, x_box_ref, w1e_ref, w1b_ref, b1_ref, w2_ref, b2_ref, o_ref):
    # First Linear: two bf16 MXU matmuls, f32 accumulation.
    h = jnp.dot(x_enc_ref[...], w1e_ref[...], preferred_element_type=jnp.float32)
    h = h + jnp.dot(x_box_ref[...], w1b_ref[...], preferred_element_type=jnp.float32)
    h = jnp.maximum(h + b1_ref[...], 0.0)                       # bias + ReLU (VPU, f32)
    # Second Linear (HID->1): VPU multiply + XLU lane reduce (no N=1 MXU matmul).
    o = jnp.sum(h * w2_ref[...], axis=-1, keepdims=True) + b2_ref[0, 0]
    # Lane-dense store: broadcast the scalar column across 128 lanes.
    o_ref[...] = jnp.broadcast_to(o, o_ref.shape)


def fc_head(x_enc, x_box, kp, *, tb=None):
    """x_enc (B, 512) bf16, x_box (B, 1800) bf16 -> (B, 1) f32."""
    B = x_enc.shape[0]
    if tb is None:
        tb = min(256, _round_up(B, 8))          # batch tile (sublane-aligned)
    Bp = _round_up(B, tb)
    if Bp != B:
        pad = Bp - B
        x_enc = jnp.pad(x_enc, ((0, pad), (0, 0)))
        x_box = jnp.pad(x_box, ((0, pad), (0, 0)))

    flops = 2 * Bp * (ENC_DIM + BOX_DIM) * HID_PAD + 4 * Bp * HID_PAD
    bytes_accessed = (
        x_enc.size * 2 + x_box.size * 2                      # bf16 activations
        + kp["w1_enc"].size * 2 + kp["w1_box"].size * 2      # bf16 weights
        + (kp["b1"].size + kp["w2"].size + kp["b2"].size) * 4
        + Bp * OUT_PAD * 4                                   # f32 output
    )

    out = pl.pallas_call(
        fc_head_kernel,
        out_shape=jax.ShapeDtypeStruct((Bp, OUT_PAD), jnp.float32),
        grid=(Bp // tb,),
        in_specs=[
            pl.BlockSpec((tb, ENC_DIM), lambda i: (i, 0)),
            pl.BlockSpec((tb, BOX_DIM), lambda i: (i, 0)),
            pl.BlockSpec((ENC_DIM, HID_PAD), lambda i: (0, 0)),   # VMEM-resident
            pl.BlockSpec((BOX_DIM, HID_PAD), lambda i: (0, 0)),   # VMEM-resident
            pl.BlockSpec((1, HID_PAD), lambda i: (0, 0)),
            pl.BlockSpec((1, HID_PAD), lambda i: (0, 0)),
            pl.BlockSpec(memory_space=pltpu.MemorySpace.SMEM),    # b2 scalar
        ],
        out_specs=pl.BlockSpec((tb, OUT_PAD), lambda i: (i, 0)),
        compiler_params=pltpu.CompilerParams(
            dimension_semantics=("parallel",)),
        cost_estimate=pl.CostEstimate(
            flops=flops, transcendentals=0, bytes_accessed=bytes_accessed),
    )(x_enc, x_box, kp["w1_enc"], kp["w1_box"], kp["b1"], kp["w2"], kp["b2"])

    return out[:B, :1]


# --------------------------------------------------------------------------
# Plain-JAX glue: _box_return2tensor semantics (data-dependent filtering with
# fixed-size masked scatters so it stays jittable).
# --------------------------------------------------------------------------
def box_return2tensor(boxes, labels, scores, sz=SZ):
    """boxes (B,N,4) f32, labels (B,N), scores (B,N) f32 -> (B, 3*sz, 6)."""

    def per_sample(bx, lb, sc):
        det = jnp.concatenate(
            [bx, lb[:, None].astype(jnp.float32), sc[:, None]], axis=1
        )  # (N, 6)  columns: x1,y1,x2,y2,label,score

        def per_class(cls):
            mask = (det[:, 5] > 0.1) & (det[:, 4] == cls)
            pos = jnp.cumsum(mask) - 1
            # keep only the first `sz` matching rows (input order), drop the rest
            pos = jnp.where(mask & (pos < sz), pos, sz)
            rows = det * mask[:, None].astype(det.dtype)
            return jnp.zeros((sz, 6), jnp.float32).at[pos].add(rows, mode="drop")

        return jnp.concatenate([per_class(c) for c in (1.0, 2.0, 3.0)], axis=0)

    return jax.vmap(per_sample)(boxes, labels, scores)


# --------------------------------------------------------------------------
# GENUINE.forward
# --------------------------------------------------------------------------
def genuine_forward(encoder_fs, boxes, labels, scores, kernel_params, ret_fs=False):
    box_fs = box_return2tensor(boxes, labels, scores, sz=SZ)     # (B, 3*sz, 6)
    B = encoder_fs.shape[0]
    x_enc = encoder_fs.reshape(B, -1).astype(jnp.bfloat16)       # (B, 512)
    x_box = box_fs.reshape(B, -1).astype(jnp.bfloat16)           # (B, 1800)
    out = fc_head(x_enc, x_box, kernel_params)                   # (B, 1) f32
    if ret_fs:
        return out, encoder_fs, box_fs
    return out


# --------------------------------------------------------------------------
# Parameter init (torch nn.Linear defaults) and kernel-layout preparation.
# --------------------------------------------------------------------------
def init_params(key):
    k1, k2, k3, k4 = jax.random.split(key, 4)
    lim1 = 1.0 / jnp.sqrt(IN_DIM)
    lim2 = 1.0 / jnp.sqrt(HID)
    return {
        "w1": jax.random.uniform(k1, (IN_DIM, HID), jnp.float32, -lim1, lim1),
        "b1": jax.random.uniform(k2, (HID,), jnp.float32, -lim1, lim1),
        "w2": jax.random.uniform(k3, (HID,), jnp.float32, -lim2, lim2),
        "b2": jax.random.uniform(k4, (1, 1), jnp.float32, -lim2, lim2),
    }


def prepare_params(p):
    """Split w1 into encoder/box halves, pad hidden 100->128, cast matmul weights to bf16."""
    pad_h = HID_PAD - HID
    w1e = p["w1"][:ENC_DIM]        # (512, 100)
    w1b = p["w1"][ENC_DIM:]        # (1800, 100)
    return {
        "w1_enc": jnp.pad(w1e, ((0, 0), (0, pad_h))).astype(jnp.bfloat16),   # (512, 128)
        "w1_box": jnp.pad(w1b, ((0, 0), (0, pad_h))).astype(jnp.bfloat16),   # (1800, 128)
        "b1": jnp.pad(p["b1"], (0, pad_h)).reshape(1, HID_PAD).astype(jnp.float32),
        "w2": jnp.pad(p["w2"], (0, pad_h)).reshape(1, HID_PAD).astype(jnp.float32),
        "b2": p["b2"].astype(jnp.float32),                                    # (1, 1) SMEM
    }


if __name__ == "__main__":
    key = jax.random.PRNGKey(0)
    kprm, ke, kb, kl, ks = jax.random.split(key, 5)

    B, N = 2, 30  # batch, synthetic detections per image

    params = init_params(kprm)
    kparams = prepare_params(params)

    encoder_fs = jax.random.normal(ke, (B, ENC_DIM), jnp.float32)
    boxes = jax.random.uniform(kb, (B, N, 4), jnp.float32, 0.0, 224.0)
    labels = jax.random.randint(kl, (B, N), 0, 5).astype(jnp.float32)
    scores = jax.random.uniform(ks, (B, N), jnp.float32, 0.0, 1.0)

    out, enc_fs, box_fs = genuine_forward(
        encoder_fs, boxes, labels, scores, kparams, ret_fs=True
    )
    out = jax.block_until_ready(out)

    assert out.shape == (B, 1)
    assert box_fs.shape == (B, 3 * SZ, 6)

    # Reference 1 (tight): emulate the exact bf16/MXU kernel path in plain JAX.
    xe = enc_fs.reshape(B, -1).astype(jnp.bfloat16)
    xb = box_fs.reshape(B, -1).astype(jnp.bfloat16)
    ref_h = jnp.maximum(
        jnp.dot(xe, kparams["w1_enc"], preferred_element_type=jnp.float32)
        + jnp.dot(xb, kparams["w1_box"], preferred_element_type=jnp.float32)
        + kparams["b1"],
        0.0,
    )
    ref_bf16 = jnp.sum(ref_h * kparams["w2"], axis=-1, keepdims=True) + kparams["b2"][0, 0]
    assert jnp.allclose(out, ref_bf16, atol=1e-2, rtol=1e-2)

    # Reference 2 (loose): full-f32 torch-semantics check (bf16 rounding slack).
    combined = jnp.concatenate([enc_fs.reshape(B, -1), box_fs.reshape(B, -1)], axis=1)
    ref_f32 = (
        jnp.maximum(combined @ params["w1"] + params["b1"][None, :], 0.0)
        @ params["w2"][:, None]
        + params["b2"]
    )
    assert jnp.allclose(out, ref_f32, atol=0.5, rtol=5e-2)

    print("KERNEL_OK")
</pallas_src>

<mosaic_0001>
module attributes {stable_mosaic.version = 11 : i64} {
  func.func @fc_head_kernel(%arg0: i32, %arg1: memref<8x512xbf16, #tpu.memory_space<vmem>>, %arg2: memref<8x1800xbf16, #tpu.memory_space<vmem>>, %arg3: memref<512x128xbf16, #tpu.memory_space<vmem>>, %arg4: memref<1800x128xbf16, #tpu.memory_space<vmem>>, %arg5: memref<1x128xf32, #tpu.memory_space<vmem>>, %arg6: memref<1x128xf32, #tpu.memory_space<vmem>>, %arg7: memref<1x1xf32, #tpu.memory_space<smem>>, %arg8: memref<8x128xf32, #tpu.memory_space<vmem>>) attributes {dimension_semantics = [#tpu.dimension_semantics<parallel>], iteration_bounds = array<i64: 1>, scalar_prefetch = 0 : i64, scratch_operands = 0 : i64, tpu.core_type = #tpu.core_type<tc>, window_params = [{transform_indices = @transform_0, window_bounds = array<i64: 8, 512>}, {transform_indices = @transform_1, window_bounds = array<i64: 8, 1800>}, {pipeline_mode = #tpu.pipeline_mode<synchronous>, transform_indices = @transform_2, window_bounds = array<i64: 512, 128>}, {pipeline_mode = #tpu.pipeline_mode<synchronous>, transform_indices = @transform_3, window_bounds = array<i64: 1800, 128>}, {pipeline_mode = #tpu.pipeline_mode<synchronous>, transform_indices = @transform_4, window_bounds = array<i64: 1, 128>}, {pipeline_mode = #tpu.pipeline_mode<synchronous>, transform_indices = @transform_5, window_bounds = array<i64: 1, 128>}, {transform_indices = @transform_6, window_bounds = array<i64: 1, 1>}, {transform_indices = @transform_7, window_bounds = array<i64: 8, 128>}]} {
    %c0 = arith.constant 0 : index
    %c0_0 = arith.constant 0 : index
    %0 = vector.load %arg1[%c0, %c0_0] : memref<8x512xbf16, #tpu.memory_space<vmem>>, vector<8x512xbf16>
    %c0_1 = arith.constant 0 : index
    %c0_2 = arith.constant 0 : index
    %1 = vector.load %arg3[%c0_1, %c0_2] : memref<512x128xbf16, #tpu.memory_space<vmem>>, vector<512x128xbf16>
    %cst = arith.constant dense<0.000000e+00> : vector<8x128xf32>
    %2 = tpu.matmul %0, %1, %cst {dimension_numbers = #tpu.dot_dimension_numbers<[1], [0], [0], [1], [0, 0, 1, 1], [], []>} : vector<8x512xbf16>, vector<512x128xbf16>, vector<8x128xf32> -> vector<8x128xf32>
    %c0_3 = arith.constant 0 : index
    %c0_4 = arith.constant 0 : index
    %3 = vector.load %arg2[%c0_3, %c0_4] : memref<8x1800xbf16, #tpu.memory_space<vmem>>, vector<8x1800xbf16>
    %c0_5 = arith.constant 0 : index
    %c0_6 = arith.constant 0 : index
    %4 = vector.load %arg4[%c0_5, %c0_6] : memref<1800x128xbf16, #tpu.memory_space<vmem>>, vector<1800x128xbf16>
    %cst_7 = arith.constant dense<0.000000e+00> : vector<8x128xf32>
    %5 = tpu.matmul %3, %4, %cst_7 {dimension_numbers = #tpu.dot_dimension_numbers<[1], [0], [0], [1], [0, 0, 1, 1], [], []>} : vector<8x1800xbf16>, vector<1800x128xbf16>, vector<8x128xf32> -> vector<8x128xf32>
    %6 = arith.addf %2, %5 : vector<8x128xf32>
    %c0_8 = arith.constant 0 : index
    %c0_9 = arith.constant 0 : index
    %7 = vector.load %arg5[%c0_8, %c0_9] : memref<1x128xf32, #tpu.memory_space<vmem>>, vector<1x128xf32>
    %8 = vector.broadcast %7 : vector<1x128xf32> to vector<8x128xf32>
    %9 = arith.addf %6, %8 : vector<8x128xf32>
    %cst_10 = arith.constant 0.000000e+00 : f32
    %10 = vector.broadcast %cst_10 : f32 to vector<8x128xf32>
    %11 = arith.maximumf %9, %10 : vector<8x128xf32>
    %c0_11 = arith.constant 0 : index
    %c0_12 = arith.constant 0 : index
    %12 = vector.load %arg6[%c0_11, %c0_12] : memref<1x128xf32, #tpu.memory_space<vmem>>, vector<1x128xf32>
    %13 = vector.broadcast %12 : vector<1x128xf32> to vector<8x128xf32>
    %14 = arith.mulf %11, %13 : vector<8x128xf32>
    %cst_13 = arith.constant dense<0.000000e+00> : vector<8xf32>
    %15 = vector.multi_reduction <add>, %14, %cst_13 [1] : vector<8x128xf32> to vector<8xf32>
    %16 = vector.shape_cast %15 : vector<8xf32> to vector<8x1xf32>
    %c0_14 = arith.constant 0 : index
    %c0_15 = arith.constant 0 : index
    %17 = memref.load %arg7[%c0_14, %c0_15] : memref<1x1xf32, #tpu.memory_space<smem>>
    %18 = vector.broadcast %17 : f32 to vector<8x1xf32>
    %19 = arith.addf %16, %18 : vector<8x1xf32>
    %20 = vector.shape_cast %19 : vector<8x1xf32> to vector<8x1xf32>
    %21 = vector.broadcast %20 : vector<8x1xf32> to vector<8x128xf32>
    %c0_16 = arith.constant 0 : index
    %c0_17 = arith.constant 0 : index
    %22 = vector.load %arg8[%c0_16, %c0_17] : memref<8x128xf32, #tpu.memory_space<vmem>>, vector<8x128xf32>
    tpu.vector_store %arg8[%c0_16, %c0_17], %21 {strides = array<i32>} : memref<8x128xf32, #tpu.memory_space<vmem>>, vector<8x128xf32>,
    return
  }
  func.func @transform_0(%arg0: i32) -> (i32, i32) {
    %c0_i32 = arith.constant 0 : i32
    %c0_i32_0 = arith.constant 0 : i32
    return %arg0, %c0_i32 : i32, i32
  }
  func.func @transform_1(%arg0: i32) -> (i32, i32) {
    %c0_i32 = arith.constant 0 : i32
    %c0_i32_0 = arith.constant 0 : i32
    return %arg0, %c0_i32 : i32, i32
  }
  func.func @transform_2(%arg0: i32) -> (i32, i32) {
    %c0_i32 = arith.constant 0 : i32
    %c0_i32_0 = arith.constant 0 : i32
    %c0_i32_1 = arith.constant 0 : i32
    return %c0_i32, %c0_i32_0 : i32, i32
  }
  func.func @transform_3(%arg0: i32) -> (i32, i32) {
    %c0_i32 = arith.constant 0 : i32
    %c0_i32_0 = arith.constant 0 : i32
    %c0_i32_1 = arith.constant 0 : i32
    return %c0_i32, %c0_i32_0 : i32, i32
  }
  func.func @transform_4(%arg0: i32) -> (i32, i32) {
    %c0_i32 = arith.constant 0 : i32
    %c0_i32_0 = arith.constant 0 : i32
    %c0_i32_1 = arith.constant 0 : i32
    return %c0_i32, %c0_i32_0 : i32, i32
  }
  func.func @transform_5(%arg0: i32) -> (i32, i32) {
    %c0_i32 = arith.constant 0 : i32
    %c0_i32_0 = arith.constant 0 : i32
    %c0_i32_1 = arith.constant 0 : i32
    return %c0_i32, %c0_i32_0 : i32, i32
  }
  func.func @transform_6(%arg0: i32) -> (i32, i32) {
    %c0_i32 = arith.constant 0 : i32
    %c0_i32_0 = arith.constant 0 : i32
    %c0_i32_1 = arith.constant 0 : i32
    return %c0_i32, %c0_i32_0 : i32, i32
  }
  func.func @transform_7(%arg0: i32) -> (i32, i32) {
    %c0_i32 = arith.constant 0 : i32
    %c0_i32_0 = arith.constant 0 : i32
    return %arg0, %c0_i32 : i32, i32
  }
}

</mosaic_0001>

<llo_original>
// kernel: tpu_custom_call.1
$region0: #{tpu_custom_call.1}
  #allocation0 [shape = 'u32[]', space=smem, size = 0x4, offset = 0x4, fixed_abs, tag = 'smem constant byte address 0x4 - core index']
  #allocation1 [shape = 'u32[144,128]{1,0:T(1,128)}', space=vmem, size = 0x12000, scoped, tag = 'internal scratch']
  #allocation2 [shape = 'f32[1,1]{1,0:T(1,128)S(6)}', space=smem, size = 0x200, scoped, tag = 'scoped memory for tpu_custom_call.1']
  %s0 = inlined_call_operand.hbm [shape: bf16[8,512], index: 0, kind: input, shape index: {}]
  %s1 = inlined_call_operand.hbm [shape: bf16[8,1800], index: 1, kind: input, shape index: {}]
  %s2 = inlined_call_operand.hbm [shape: bf16[512,128], index: 2, kind: input, shape index: {}]
  %s3 = inlined_call_operand.hbm [shape: bf16[1800,128], index: 3, kind: input, shape index: {}]
  %s4 = inlined_call_operand.vmem [shape: f32[1,128], index: 4, kind: input, shape index: {}]
  %s5 = inlined_call_operand.vmem [shape: f32[1,128], index: 5, kind: input, shape index: {}]
  %s6 = inlined_call_operand.<no memory space> [shape: f32[1,1], index: 6, kind: input, shape index: {}]
  %s7 = inlined_call_operand.hbm [shape: f32[8,128], index: 7, kind: output, shape index: {}]
  %s8 = sld [smem:[#allocation0]]
  $region54: #{tpu_custom_call.1} parent=0
    _
  %s10 = ssub.s32 1, %s8
  %s11 = scalar_select 0, %s10, %s8
  %12 = sst [smem:[#allocation2]] %s6
  $region1: #{tpu_custom_call.1} parent=0
    #allocation3 [shape = 'u8[8192]{0}', space=vmem, size = 0x2000, scoped, tag = 'input window, operand 0, single buffered']
    #allocation4 [shape = 's32[1]{0}', space=sflag, size = 0x4, scoped, tag = 'scoped memory for tpu_custom_call.1']
    #allocation5 [shape = 's32[1]{0}', space=sflag, size = 0x4, scoped, tag = 'scoped memory for tpu_custom_call.1']
    #allocation6 [shape = 'u8[30720]{0}', space=vmem, size = 0x7800, scoped, tag = 'input window, operand 1, single buffered']
    #allocation7 [shape = 's32[1]{0}', space=sflag, size = 0x4, scoped, tag = 'scoped memory for tpu_custom_call.1']
    #allocation8 [shape = 'u8[131072]{0}', space=vmem, size = 0x20000, scoped, tag = 'input window, operand 2, single buffered']
    #allocation9 [shape = 'u8[460800]{0}', space=vmem, size = 0x70800, scoped, tag = 'input window, operand 3, single buffered']
    #allocation10 [shape = 's32[1]{0}', space=sflag, size = 0x4, scoped, tag = 'scoped memory for tpu_custom_call.1']
    #allocation11 [shape = 'u8[4096]{0}', space=vmem, size = 0x1000, scoped, tag = 'output window, operand 0, single buffered']
    %13 = vsyncpa [#allocation4], 0
    %14 = vsyncpa [#allocation7], 0
    %15 = vsyncpa [#allocation10], 0
    %16 = vsyncpa [#allocation5], 0
    // Predicated region
    $region2: #{tpu_custom_call.1} parent=1 // pred_check
      _
    $region3: #{tpu_custom_call.1} parent=1 // pred_check_branch
      %18 = sbr.rel (0) target = $region5
    $region4: #{tpu_custom_call.1} parent=1 // pred_region
      %s20 = ssub.s32 256, 256
      %21 = vsyncadd [#allocation4], %s20
      %s23 = sshll.u32 [#allocation3], 4
      %s24 = int_to_ptr.vmem [resolvable:$true] %s23
      %26 = dma.hbm_to_vmem [thread:$0]  %s0, 256, %s24, [#allocation4]
    $region5: #{tpu_custom_call.1} parent=1 // pred_fallthru
      _
    // Predicated region
    $region6: #{tpu_custom_call.1} parent=1 // pred_check
      _
    $region7: #{tpu_custom_call.1} parent=1 // pred_check_branch
      %28 = sbr.rel (0) target = $region9
    $region8: #{tpu_custom_call.1} parent=1 // pred_region
      %s30 = ssub.s32 960, 960
      %31 = vsyncadd [#allocation7], %s30
      %s33 = sshll.u32 [#allocation6], 4
      %s34 = int_to_ptr.vmem [resolvable:$true] %s33
      %36 = dma.hbm_to_vmem [thread:$0]  %s1, 960, %s34, [#allocation7]
    $region9: #{tpu_custom_call.1} parent=1 // pred_fallthru
      _
    // Predicated region
    $region10: #{tpu_custom_call.1} parent=1 // pred_check
      _
    $region11: #{tpu_custom_call.1} parent=1 // pred_check_branch
      %38 = sbr.rel (0) target = $region13
    $region12: #{tpu_custom_call.1} parent=1 // pred_region
      %s40 = ssub.s32 4096, 4096
      %41 = vsyncadd [#allocation7], %s40
      %s42 = sshll.u32 [#allocation8], 4
      %s43 = int_to_ptr.vmem [resolvable:$true] %s42
      %48 = dma.hbm_to_vmem [thread:$0]  %s2, 4096, %s43, [#allocation7], 64, 64, 4
    $region13: #{tpu_custom_call.1} parent=1 // pred_fallthru
      _
    // Predicated region
    $region14: #{tpu_custom_call.1} parent=1 // pred_check
      _
    $region15: #{tpu_custom_call.1} parent=1 // pred_check_branch
      %50 = sbr.rel (0) target = $region17
    $region16: #{tpu_custom_call.1} parent=1 // pred_region
      %s52 = ssub.s32 14400, 14400
      %53 = vsyncadd [#allocation10], %s52
      %s54 = sshll.u32 [#allocation9], 4
      %s55 = int_to_ptr.vmem [resolvable:$true] %s54
      %60 = dma.hbm_to_vmem [thread:$0]  %s3, 14400, %s55, [#allocation10], 64, 64, 4
    $region17: #{tpu_custom_call.1} parent=1 // pred_fallthru
      _
    // Predicated region
    $region18: #{tpu_custom_call.1} parent=1 // pred_check
      _
    $region19: #{tpu_custom_call.1} parent=1 // pred_check_branch
      %62 = sbr.rel (0) target = $region21
    $region20: #{tpu_custom_call.1} parent=1 // pred_region
      _
    $region21: #{tpu_custom_call.1} parent=1 // pred_fallthru
      _
    // Predicated region
    $region22: #{tpu_custom_call.1} parent=1 // pred_check
      _
    $region23: #{tpu_custom_call.1} parent=1 // pred_check_branch
      %64 = sbr.rel (0) target = $region25
    $region24: #{tpu_custom_call.1} parent=1 // pred_region
      _
    $region25: #{tpu_custom_call.1} parent=1 // pred_fallthru
      _
    // Predicated region
    $region26: #{tpu_custom_call.1} parent=1 // pred_check
      _
    $region27: #{tpu_custom_call.1} parent=1 // pred_check_branch
      %66 = sbr.rel (0) target = $region29
    $region28: #{tpu_custom_call.1} parent=1 // pred_region
      _
    $region29: #{tpu_custom_call.1} parent=1 // pred_fallthru
      _
    // Predicated region
    $region30: #{tpu_custom_call.1} parent=1 // pred_check
      _
    $region31: #{tpu_custom_call.1} parent=1 // pred_check_branch
      %68 = sbr.rel (0) target = $region33
    $region32: #{tpu_custom_call.1} parent=1 // pred_region
      %69 = dma.done [#allocation4], 256
    $region33: #{tpu_custom_call.1} parent=1 // pred_fallthru
      _
    // Predicated region
    $region34: #{tpu_custom_call.1} parent=1 // pred_check
      _
    $region35: #{tpu_custom_call.1} parent=1 // pred_check_branch
      %71 = sbr.rel (0) target = $region37
    $region36: #{tpu_custom_call.1} parent=1 // pred_region
      %72 = dma.done [#allocation7], 960
    $region37: #{tpu_custom_call.1} parent=1 // pred_fallthru
      _
    // Predicated region
    $region38: #{tpu_custom_call.1} parent=1 // pred_check
      _
    $region39: #{tpu_custom_call.1} parent=1 // pred_check_branch
      %74 = sbr.rel (0) target = $region41
    $region40: #{tpu_custom_call.1} parent=1 // pred_region
      %75 = dma.done [#allocation7], 4096
    $region41: #{tpu_custom_call.1} parent=1 // pred_fallthru
      _
    // Predicated region
    $region42: #{tpu_custom_call.1} parent=1 // pred_check
      _
    $region43: #{tpu_custom_call.1} parent=1 // pred_check_branch
      %77 = sbr.rel (0) target = $region45
    $region44: #{tpu_custom_call.1} parent=1 // pred_region
      %78 = dma.done [#allocation10], 14400
    $region45: #{tpu_custom_call.1} parent=1 // pred_fallthru
      _
    %v80 = vld [vmem:[#allocation3] sm:$0xff]
    %v81 = vld [vmem:[#allocation3 + $0x8] sm:$0xff]
    %v82 = vld [vmem:[#allocation8] sm:$0xf]
    %v83 = vld [vmem:[#allocation8 + $0x4] sm:$0xf]
    %v84 = vld [vmem:[#allocation8 + $0x8] sm:$0xf]
    %v85 = vld [vmem:[#allocation8 + $0xc] sm:$0xf]
    %v86 = vld [vmem:[#allocation8 + $0x10] sm:$0xf]
    %v87 = vld [vmem:[#allocation8 + $0x14] sm:$0xf]
    %v88 = vld [vmem:[#allocation8 + $0x18] sm:$0xf]
    %v89 = vld [vmem:[#allocation8 + $0x1c] sm:$0xf]
    %v90 = vld [vmem:[#allocation8 + $0x20] sm:$0xf]
    %v91 = vld [vmem:[#allocation8 + $0x24] sm:$0xf]
    %v92 = vld [vmem:[#allocation8 + $0x28] sm:$0xf]
    %v93 = vld [vmem:[#allocation8 + $0x2c] sm:$0xf]
    %v94 = vld [vmem:[#allocation8 + $0x30] sm:$0xf]
    %v95 = vld [vmem:[#allocation8 + $0x34] sm:$0xf]
    %v96 = vld [vmem:[#allocation8 + $0x38] sm:$0xf]
    %v97 = vld [vmem:[#allocation8 + $0x3c] sm:$0xf]
    %v98 = vld [vmem:[#allocation8 + $0x40] sm:$0xf]
    %v99 = vld [vmem:[#allocation8 + $0x44] sm:$0xf]
    %v100 = vld [vmem:[#allocation8 + $0x48] sm:$0xf]
    %v101 = vld [vmem:[#allocation8 + $0x4c] sm:$0xf]
    %v102 = vld [vmem:[#allocation8 + $0x50] sm:$0xf]
    %v103 = vld [vmem:[#allocation8 + $0x54] sm:$0xf]
    %v104 = vld [vmem:[#allocation8 + $0x58] sm:$0xf]
    %v105 = vld [vmem:[#allocation8 + $0x5c] sm:$0xf]
    %v106 = vld [vmem:[#allocation8 + $0x60] sm:$0xf]
    %v107 = vld [vmem:[#allocation8 + $0x64] sm:$0xf]
    %v108 = vld [vmem:[#allocation8 + $0x68] sm:$0xf]
    %v109 = vld [vmem:[#allocation8 + $0x6c] sm:$0xf]
    %v110 = vld [vmem:[#allocation8 + $0x70] sm:$0xf]
    %v111 = vld [vmem:[#allocation8 + $0x74] sm:$0xf]
    %v112 = vld [vmem:[#allocation8 + $0x78] sm:$0xf]
    %v113 = vld [vmem:[#allocation8 + $0x7c] sm:$0xf]
    %v114 = vld [vmem:[#allocation8 + $0x80] sm:$0xf]
    %v115 = vld [vmem:[#allocation8 + $0x84] sm:$0xf]
    %v116 = vld [vmem:[#allocation8 + $0x88] sm:$0xf]
    %v117 = vld [vmem:[#allocation8 + $0x8c] sm:$0xf]
    %v118 = vld [vmem:[#allocation8 + $0x90] sm:$0xf]
    %v119 = vld [vmem:[#allocation8 + $0x94] sm:$0xf]
    %v120 = vld [vmem:[#allocation8 + $0x98] sm:$0xf]
    %v121 = vld [vmem:[#allocation8 + $0x9c] sm:$0xf]
    %v122 = vld [vmem:[#allocation8 + $0xa0] sm:$0xf]
    %v123 = vld [vmem:[#allocation8 + $0xa4] sm:$0xf]
    %v124 = vld [vmem:[#allocation8 + $0xa8] sm:$0xf]
    %v125 = vld [vmem:[#allocation8 + $0xac] sm:$0xf]
    %v126 = vld [vmem:[#allocation8 + $0xb0] sm:$0xf]
    %v127 = vld [vmem:[#allocation8 + $0xb4] sm:$0xf]
    %v128 = vld [vmem:[#allocation8 + $0xb8] sm:$0xf]
    %v129 = vld [vmem:[#allocation8 + $0xbc] sm:$0xf]
    %v130 = vld [vmem:[#allocation8 + $0xc0] sm:$0xf]
    %v131 = vld [vmem:[#allocation8 + $0xc4] sm:$0xf]
    %v132 = vld [vmem:[#allocation8 + $0xc8] sm:$0xf]
    %v133 = vld [vmem:[#allocation8 + $0xcc] sm:$0xf]
    %v134 = vld [vmem:[#allocation8 + $0xd0] sm:$0xf]
    %v135 = vld [vmem:[#allocation8 + $0xd4] sm:$0xf]
    %v136 = vld [vmem:[#allocation8 + $0xd8] sm:$0xf]
    %v137 = vld [vmem:[#allocation8 + $0xdc] sm:$0xf]
    %v138 = vld [vmem:[#allocation8 + $0xe0] sm:$0xf]
    %v139 = vld [vmem:[#allocation8 + $0xe4] sm:$0xf]
    %v140 = vld [vmem:[#allocation8 + $0xe8] sm:$0xf]
    %v141 = vld [vmem:[#allocation8 + $0xec] sm:$0xf]
    %v142 = vld [vmem:[#allocation8 + $0xf0] sm:$0xf]
    %v143 = vld [vmem:[#allocation8 + $0xf4] sm:$0xf]
    %v144 = vld [vmem:[#allocation8 + $0xf8] sm:$0xf]
    %v145 = vld [vmem:[#allocation8 + $0xfc] sm:$0xf]
    %v146 = vld [vmem:[#allocation6] sm:$0xff]
    %v147 = vld [vmem:[#allocation6 + $0x8] sm:$0xff]
    %v148 = vld [vmem:[#allocation6 + $0x10] sm:$0xff]
    %v149 = vld [vmem:[#allocation6 + $0x18] sm:$0xff]
    %v150 = vld [vmem:[#allocation6 + $0x20] sm:$0xff]
    %v151 = vld [vmem:[#allocation6 + $0x28] sm:$0xff]
    %v152 = vld [vmem:[#allocation6 + $0x30] sm:$0xff]
    %v153 = vld [vmem:[#allocation6 + $0x38] sm:$0xf]
    %v154 = vld [vmem:[#allocation9] sm:$0xf]
    %v155 = vld [vmem:[#allocation9 + $0x4] sm:$0xf]
    %v156 = vld [vmem:[#allocation9 + $0x8] sm:$0xf]
    %v157 = vld [vmem:[#allocation9 + $0xc] sm:$0xf]
    %v158 = vld [vmem:[#allocation9 + $0x10] sm:$0xf]
    %v159 = vld [vmem:[#allocation9 + $0x14] sm:$0xf]
    %v160 = vld [vmem:[#allocation9 + $0x18] sm:$0xf]
    %v161 = vld [vmem:[#allocation9 + $0x1c] sm:$0xf]
    %v162 = vld [vmem:[#allocation9 + $0x20] sm:$0xf]
    %v163 = vld [vmem:[#allocation9 + $0x24] sm:$0xf]
    %v164 = vld [vmem:[#allocation9 + $0x28] sm:$0xf]
    %v165 = vld [vmem:[#allocation9 + $0x2c] sm:$0xf]
    %v166 = vld [vmem:[#allocation9 + $0x30] sm:$0xf]
    %v167 = vld [vmem:[#allocation9 + $0x34] sm:$0xf]
    %v168 = vld [vmem:[#allocation9 + $0x38] sm:$0xf]
    %v169 = vld [vmem:[#allocation9 + $0x3c] sm:$0xf]
    %v170 = vld [vmem:[#allocation9 + $0x40] sm:$0xf]
    %v171 = vld [vmem:[#allocation9 + $0x44] sm:$0xf]
    %v172 = vld [vmem:[#allocation9 + $0x48] sm:$0xf]
    %v173 = vld [vmem:[#allocation9 + $0x4c] sm:$0xf]
    %v174 = vld [vmem:[#allocation9 + $0x50] sm:$0xf]
    %v175 = vld [vmem:[#allocation9 + $0x54] sm:$0xf]
    %v176 = vld [vmem:[#allocation9 + $0x58] sm:$0xf]
    %v177 = vld [vmem:[#allocation9 + $0x5c] sm:$0xf]
    %v178 = vld [vmem:[#allocation9 + $0x60] sm:$0xf]
    %v179 = vld [vmem:[#allocation9 + $0x64] sm:$0xf]
    %v180 = vld [vmem:[#allocation9 + $0x68] sm:$0xf]
    %v181 = vld [vmem:[#allocation9 + $0x6c] sm:$0xf]
    %v182 = vld [vmem:[#allocation9 + $0x70] sm:$0xf]
    %v183 = vld [vmem:[#allocation9 + $0x74] sm:$0xf]
    %v184 = vld [vmem:[#allocation9 + $0x78] sm:$0xf]
    %v185 = vld [vmem:[#allocation9 + $0x7c] sm:$0xf]
    %v186 = vld [vmem:[#allocation9 + $0x80] sm:$0xf]
    %v187 = vld [vmem:[#allocation9 + $0x84] sm:$0xf]
    %v188 = vld [vmem:[#allocation9 + $0x88] sm:$0xf]
    %v189 = vld [vmem:[#allocation9 + $0x8c] sm:$0xf]
    %v190 = vld [vmem:[#allocation9 + $0x90] sm:$0xf]
    %v191 = vld [vmem:[#allocation9 + $0x94] sm:$0xf]
    %v192 = vld [vmem:[#allocation9 + $0x98] sm:$0xf]
    %v193 = vld [vmem:[#allocation9 + $0x9c] sm:$0xf]
    %v194 = vld [vmem:[#allocation9 + $0xa0] sm:$0xf]
    %v195 = vld [vmem:[#allocation9 + $0xa4] sm:$0xf]
    %v196 = vld [vmem:[#allocation9 + $0xa8] sm:$0xf]
    %v197 = vld [vmem:[#allocation9 + $0xac] sm:$0xf]
    %v198 = vld [vmem:[#allocation9 + $0xb0] sm:$0xf]
    %v199 = vld [vmem:[#allocation9 + $0xb4] sm:$0xf]
    %v200 = vld [vmem:[#allocation9 + $0xb8] sm:$0xf]
    %v201 = vld [vmem:[#allocation9 + $0xbc] sm:$0xf]
    %v202 = vld [vmem:[#allocation9 + $0xc0] sm:$0xf]
    %v203 = vld [vmem:[#allocation9 + $0xc4] sm:$0xf]
    %v204 = vld [vmem:[#allocation9 + $0xc8] sm:$0xf]
    %v205 = vld [vmem:[#allocation9 + $0xcc] sm:$0xf]
    %v206 = vld [vmem:[#allocation9 + $0xd0] sm:$0xf]
    %v207 = vld [vmem:[#allocation9 + $0xd4] sm:$0xf]
    %v208 = vld [vmem:[#allocation9 + $0xd8] sm:$0xf]
    %v209 = vld [vmem:[#allocation9 + $0xdc] sm:$0xf]
    %v210 = vld [vmem:[#allocation9 + $0xe0] sm:$0xf]
    %v211 = vld [vmem:[#allocation9 + $0xe4] sm:$0xf]
    %v212 = vld [vmem:[#allocation9 + $0xe8] sm:$0xf]
    %v213 = vld [vmem:[#allocation9 + $0xec] sm:$0xf]
    %v214 = vld [vmem:[#allocation9 + $0xf0] sm:$0xf]
    %v215 = vld [vmem:[#allocation9 + $0xf4] sm:$0xf]
    %v216 = vld [vmem:[#allocation9 + $0xf8] sm:$0xf]
    %v217 = vld [vmem:[#allocation9 + $0xfc] sm:$0xf]
    %v218 = vld [vmem:[#allocation9 + $0x100] sm:$0xf]
    %v219 = vld [vmem:[#allocation9 + $0x104] sm:$0xf]
    %v220 = vld [vmem:[#allocation9 + $0x108] sm:$0xf]
    %v221 = vld [vmem:[#allocation9 + $0x10c] sm:$0xf]
    %v222 = vld [vmem:[#allocation9 + $0x110] sm:$0xf]
    %v223 = vld [vmem:[#allocation9 + $0x114] sm:$0xf]
    %v224 = vld [vmem:[#allocation9 + $0x118] sm:$0xf]
    %v225 = vld [vmem:[#allocation9 + $0x11c] sm:$0xf]
    %v226 = vld [vmem:[#allocation9 + $0x120] sm:$0xf]
    %v227 = vld [vmem:[#allocation9 + $0x124] sm:$0xf]
    %v228 = vld [vmem:[#allocation9 + $0x128] sm:$0xf]
    %v229 = vld [vmem:[#allocation9 + $0x12c] sm:$0xf]
    %v230 = vld [vmem:[#allocation9 + $0x130] sm:$0xf]
    %v231 = vld [vmem:[#allocation9 + $0x134] sm:$0xf]
    %v232 = vld [vmem:[#allocation9 + $0x138] sm:$0xf]
    %v233 = vld [vmem:[#allocation9 + $0x13c] sm:$0xf]
    %v234 = vld [vmem:[#allocation9 + $0x140] sm:$0xf]
    %v235 = vld [vmem:[#allocation9 + $0x144] sm:$0xf]
    %v236 = vld [vmem:[#allocation9 + $0x148] sm:$0xf]
    %v237 = vld [vmem:[#allocation9 + $0x14c] sm:$0xf]
    %v238 = vld [vmem:[#allocation9 + $0x150] sm:$0xf]
    %v239 = vld [vmem:[#allocation9 + $0x154] sm:$0xf]
    %v240 = vld [vmem:[#allocation9 + $0x158] sm:$0xf]
    %v241 = vld [vmem:[#allocation9 + $0x15c] sm:$0xf]
    %v242 = vld [vmem:[#allocation9 + $0x160] sm:$0xf]
    %v243 = vld [vmem:[#allocation9 + $0x164] sm:$0xf]
    %v244 = vld [vmem:[#allocation9 + $0x168] sm:$0xf]
    %v245 = vld [vmem:[#allocation9 + $0x16c] sm:$0xf]
    %v246 = vld [vmem:[#allocation9 + $0x170] sm:$0xf]
    %v247 = vld [vmem:[#allocation9 + $0x174] sm:$0xf]
    %v248 = vld [vmem:[#allocation9 + $0x178] sm:$0xf]
    %v249 = vld [vmem:[#allocation9 + $0x17c] sm:$0xf]
    %v250 = vld [vmem:[#allocation9 + $0x180] sm:$0xf]
    %v251 = vld [vmem:[#allocation9 + $0x184] sm:$0xf]
    %v252 = vld [vmem:[#allocation9 + $0x188] sm:$0xf]
    %v253 = vld [vmem:[#allocation9 + $0x18c] sm:$0xf]
    %v254 = vld [vmem:[#allocation9 + $0x190] sm:$0xf]
    %v255 = vld [vmem:[#allocation9 + $0x194] sm:$0xf]
    %v256 = vld [vmem:[#allocation9 + $0x198] sm:$0xf]
    %v257 = vld [vmem:[#allocation9 + $0x19c] sm:$0xf]
    %v258 = vld [vmem:[#allocation9 + $0x1a0] sm:$0xf]
    %v259 = vld [vmem:[#allocation9 + $0x1a4] sm:$0xf]
    %v260 = vld [vmem:[#allocation9 + $0x1a8] sm:$0xf]
    %v261 = vld [vmem:[#allocation9 + $0x1ac] sm:$0xf]
    %v262 = vld [vmem:[#allocation9 + $0x1b0] sm:$0xf]
    %v263 = vld [vmem:[#allocation9 + $0x1b4] sm:$0xf]
    %v264 = vld [vmem:[#allocation9 + $0x1b8] sm:$0xf]
    %v265 = vld [vmem:[#allocation9 + $0x1bc] sm:$0xf]
    %v266 = vld [vmem:[#allocation9 + $0x1c0] sm:$0xf]
    %v267 = vld [vmem:[#allocation9 + $0x1c4] sm:$0xf]
    %v268 = vld [vmem:[#allocation9 + $0x1c8] sm:$0xf]
    %v269 = vld [vmem:[#allocation9 + $0x1cc] sm:$0xf]
    %v270 = vld [vmem:[#allocation9 + $0x1d0] sm:$0xf]
    %v271 = vld [vmem:[#allocation9 + $0x1d4] sm:$0xf]
    %v272 = vld [vmem:[#allocation9 + $0x1d8] sm:$0xf]
    %v273 = vld [vmem:[#allocation9 + $0x1dc] sm:$0xf]
    %v274 = vld [vmem:[#allocation9 + $0x1e0] sm:$0xf]
    %v275 = vld [vmem:[#allocation9 + $0x1e4] sm:$0xf]
    %v276 = vld [vmem:[#allocation9 + $0x1e8] sm:$0xf]
    %v277 = vld [vmem:[#allocation9 + $0x1ec] sm:$0xf]
    %v278 = vld [vmem:[#allocation9 + $0x1f0] sm:$0xf]
    %v279 = vld [vmem:[#allocation9 + $0x1f4] sm:$0xf]
    %v280 = vld [vmem:[#allocation9 + $0x1f8] sm:$0xf]
    %v281 = vld [vmem:[#allocation9 + $0x1fc] sm:$0xf]
    %v282 = vld [vmem:[#allocation9 + $0x200] sm:$0xf]
    %v283 = vld [vmem:[#allocation9 + $0x204] sm:$0xf]
    %v284 = vld [vmem:[#allocation9 + $0x208] sm:$0xf]
    %v285 = vld [vmem:[#allocation9 + $0x20c] sm:$0xf]
    %v286 = vld [vmem:[#allocation9 + $0x210] sm:$0xf]
    %v287 = vld [vmem:[#allocation9 + $0x214] sm:$0xf]
    %v288 = vld [vmem:[#allocation9 + $0x218] sm:$0xf]
    %v289 = vld [vmem:[#allocation9 + $0x21c] sm:$0xf]
    %v290 = vld [vmem:[#allocation9 + $0x220] sm:$0xf]
    %v291 = vld [vmem:[#allocation9 + $0x224] sm:$0xf]
    %v292 = vld [vmem:[#allocation9 + $0x228] sm:$0xf]
    %v293 = vld [vmem:[#allocation9 + $0x22c] sm:$0xf]
    %v294 = vld [vmem:[#allocation9 + $0x230] sm:$0xf]
    %v295 = vld [vmem:[#allocation9 + $0x234] sm:$0xf]
    %v296 = vld [vmem:[#allocation9 + $0x238] sm:$0xf]
    %v297 = vld [vmem:[#allocation9 + $0x23c] sm:$0xf]
    %v298 = vld [vmem:[#allocation9 + $0x240] sm:$0xf]
    %v299 = vld [vmem:[#allocation9 + $0x244] sm:$0xf]
    %v300 = vld [vmem:[#allocation9 + $0x248] sm:$0xf]
    %v301 = vld [vmem:[#allocation9 + $0x24c] sm:$0xf]
    %v302 = vld [vmem:[#allocation9 + $0x250] sm:$0xf]
    %v303 = vld [vmem:[#allocation9 + $0x254] sm:$0xf]
    %v304 = vld [vmem:[#allocation9 + $0x258] sm:$0xf]
    %v305 = vld [vmem:[#allocation9 + $0x25c] sm:$0xf]
    %v306 = vld [vmem:[#allocation9 + $0x260] sm:$0xf]
    %v307 = vld [vmem:[#allocation9 + $0x264] sm:$0xf]
    %v308 = vld [vmem:[#allocation9 + $0x268] sm:$0xf]
    %v309 = vld [vmem:[#allocation9 + $0x26c] sm:$0xf]
    %v310 = vld [vmem:[#allocation9 + $0x270] sm:$0xf]
    %v311 = vld [vmem:[#allocation9 + $0x274] sm:$0xf]
    %v312 = vld [vmem:[#allocation9 + $0x278] sm:$0xf]
    %v313 = vld [vmem:[#allocation9 + $0x27c] sm:$0xf]
    %v314 = vld [vmem:[#allocation9 + $0x280] sm:$0xf]
    %v315 = vld [vmem:[#allocation9 + $0x284] sm:$0xf]
    %v316 = vld [vmem:[#allocation9 + $0x288] sm:$0xf]
    %v317 = vld [vmem:[#allocation9 + $0x28c] sm:$0xf]
    %v318 = vld [vmem:[#allocation9 + $0x290] sm:$0xf]
    %v319 = vld [vmem:[#allocation9 + $0x294] sm:$0xf]
    %v320 = vld [vmem:[#allocation9 + $0x298] sm:$0xf]
    %v321 = vld [vmem:[#allocation9 + $0x29c] sm:$0xf]
    %v322 = vld [vmem:[#allocation9 + $0x2a0] sm:$0xf]
    %v323 = vld [vmem:[#allocation9 + $0x2a4] sm:$0xf]
    %v324 = vld [vmem:[#allocation9 + $0x2a8] sm:$0xf]
    %v325 = vld [vmem:[#allocation9 + $0x2ac] sm:$0xf]
    %v326 = vld [vmem:[#allocation9 + $0x2b0] sm:$0xf]
    %v327 = vld [vmem:[#allocation9 + $0x2b4] sm:$0xf]
    %v328 = vld [vmem:[#allocation9 + $0x2b8] sm:$0xf]
    %v329 = vld [vmem:[#allocation9 + $0x2bc] sm:$0xf]
    %v330 = vld [vmem:[#allocation9 + $0x2c0] sm:$0xf]
    %v331 = vld [vmem:[#allocation9 + $0x2c4] sm:$0xf]
    %v332 = vld [vmem:[#allocation9 + $0x2c8] sm:$0xf]
    %v333 = vld [vmem:[#allocation9 + $0x2cc] sm:$0xf]
    %v334 = vld [vmem:[#allocation9 + $0x2d0] sm:$0xf]
    %v335 = vld [vmem:[#allocation9 + $0x2d4] sm:$0xf]
    %v336 = vld [vmem:[#allocation9 + $0x2d8] sm:$0xf]
    %v337 = vld [vmem:[#allocation9 + $0x2dc] sm:$0xf]
    %v338 = vld [vmem:[#allocation9 + $0x2e0] sm:$0xf]
    %v339 = vld [vmem:[#allocation9 + $0x2e4] sm:$0xf]
    %v340 = vld [vmem:[#allocation9 + $0x2e8] sm:$0xf]
    %v341 = vld [vmem:[#allocation9 + $0x2ec] sm:$0xf]
    %v342 = vld [vmem:[#allocation9 + $0x2f0] sm:$0xf]
    %v343 = vld [vmem:[#allocation9 + $0x2f4] sm:$0xf]
    %v344 = vld [vmem:[#allocation9 + $0x2f8] sm:$0xf]
    %v345 = vld [vmem:[#allocation9 + $0x2fc] sm:$0xf]
    %v346 = vld [vmem:[#allocation9 + $0x300] sm:$0xf]
    %v347 = vld [vmem:[#allocation9 + $0x304] sm:$0xf]
    %v348 = vld [vmem:[#allocation9 + $0x308] sm:$0xf]
    %v349 = vld [vmem:[#allocation9 + $0x30c] sm:$0xf]
    %v350 = vld [vmem:[#allocation9 + $0x310] sm:$0xf]
    %v351 = vld [vmem:[#allocation9 + $0x314] sm:$0xf]
    %v352 = vld [vmem:[#allocation9 + $0x318] sm:$0xf]
    %v353 = vld [vmem:[#allocation9 + $0x31c] sm:$0xf]
    %v354 = vld [vmem:[#allocation9 + $0x320] sm:$0xf]
    %v355 = vld [vmem:[#allocation9 + $0x324] sm:$0xf]
    %v356 = vld [vmem:[#allocation9 + $0x328] sm:$0xf]
    %v357 = vld [vmem:[#allocation9 + $0x32c] sm:$0xf]
    %v358 = vld [vmem:[#allocation9 + $0x330] sm:$0xf]
    %v359 = vld [vmem:[#allocation9 + $0x334] sm:$0xf]
    %v360 = vld [vmem:[#allocation9 + $0x338] sm:$0xf]
    %v361 = vld [vmem:[#allocation9 + $0x33c] sm:$0xf]
    %v362 = vld [vmem:[#allocation9 + $0x340] sm:$0xf]
    %v363 = vld [vmem:[#allocation9 + $0x344] sm:$0xf]
    %v364 = vld [vmem:[#allocation9 + $0x348] sm:$0xf]
    %v365 = vld [vmem:[#allocation9 + $0x34c] sm:$0xf]
    %v366 = vld [vmem:[#allocation9 + $0x350] sm:$0xf]
    %v367 = vld [vmem:[#allocation9 + $0x354] sm:$0xf]
    %v368 = vld [vmem:[#allocation9 + $0x358] sm:$0xf]
    %v369 = vld [vmem:[#allocation9 + $0x35c] sm:$0xf]
    %v370 = vld [vmem:[#allocation9 + $0x360] sm:$0xf]
    %v371 = vld [vmem:[#allocation9 + $0x364] sm:$0xf]
    %v372 = vld [vmem:[#allocation9 + $0x368] sm:$0xf]
    %v373 = vld [vmem:[#allocation9 + $0x36c] sm:$0xf]
    %v374 = vld [vmem:[#allocation9 + $0x370] sm:$0xf]
    %v375 = vld [vmem:[#allocation9 + $0x374] sm:$0xf]
    %v376 = vld [vmem:[#allocation9 + $0x378] sm:$0xf]
    %v377 = vld [vmem:[#allocation9 + $0x37c] sm:$0xf]
    %v378 = vld [vmem:[#allocation9 + $0x380] sm:$0xf]
    %v387 = vunpack.c.l.b16 %v146
    %v388 = vunpack.c.h.b16 %v146
    %v389 = vunpack.c.l.b16 %v147
    %v390 = vunpack.c.h.b16 %v147
    %v391 = vunpack.c.l.b16 %v148
    %v392 = vunpack.c.h.b16 %v148
    %v393 = vunpack.c.l.b16 %v149
    %v394 = vunpack.c.h.b16 %v149
    %v395 = vunpack.c.l.b16 %v150
    %v396 = vunpack.c.h.b16 %v150
    %v397 = vunpack.c.l.b16 %v151
    %v398 = vunpack.c.h.b16 %v151
    %v399 = vunpack.c.l.b16 %v152
    %v400 = vunpack.c.h.b16 %v152
    %v401 = vunpack.c.l.b16 %v153
    %v402 = vpack.c.b16 %v387, %v387
    %v403 = vpack.c.b16 %v388, %v388
    %v404 = vpack.c.b16 %v389, %v389
    %v405 = vpack.c.b16 %v390, %v390
    %v406 = vpack.c.b16 %v391, %v391
    %v407 = vpack.c.b16 %v392, %v392
    %v408 = vpack.c.b16 %v393, %v393
    %v409 = vpack.c.b16 %v394, %v394
    %v410 = vpack.c.b16 %v395, %v395
    %v411 = vpack.c.b16 %v396, %v396
    %v412 = vpack.c.b16 %v397, %v397
    %v413 = vpack.c.b16 %v398, %v398
    %v414 = vpack.c.b16 %v399, %v399
    %v415 = vpack.c.b16 %v400, %v400
    %v416 = vpack.c.b16 %v401, %v401
    %v656 = vunpack.c.l.b16 %v154
    %v657 = vunpack.c.l.b16 %v155
    %v658 = vunpack.c.l.b16 %v156
    %v659 = vunpack.c.l.b16 %v157
    %v660 = vunpack.c.l.b16 %v158
    %v661 = vunpack.c.l.b16 %v159
    %v662 = vunpack.c.l.b16 %v160
    %v663 = vunpack.c.l.b16 %v161
    %v664 = vunpack.c.l.b16 %v162
    %v665 = vunpack.c.l.b16 %v163
    %v666 = vunpack.c.l.b16 %v164
    %v667 = vunpack.c.l.b16 %v165
    %v668 = vunpack.c.l.b16 %v166
    %v669 = vunpack.c.l.b16 %v167
    %v670 = vunpack.c.l.b16 %v168
    %v671 = vunpack.c.l.b16 %v169
    %v672 = vunpack.c.l.b16 %v170
    %v673 = vunpack.c.l.b16 %v171
    %v674 = vunpack.c.l.b16 %v172
    %v675 = vunpack.c.l.b16 %v173
    %v676 = vunpack.c.l.b16 %v174
    %v677 = vunpack.c.l.b16 %v175
    %v678 = vunpack.c.l.b16 %v176
    %v679 = vunpack.c.l.b16 %v177
    %v680 = vunpack.c.l.b16 %v178
    %v681 = vunpack.c.l.b16 %v179
    %v682 = vunpack.c.l.b16 %v180
    %v683 = vunpack.c.l.b16 %v181
    %v684 = vunpack.c.l.b16 %v182
    %v685 = vunpack.c.l.b16 %v183
    %v686 = vunpack.c.l.b16 %v184
    %v687 = vunpack.c.l.b16 %v185
    %v688 = vunpack.c.l.b16 %v186
    %v689 = vunpack.c.l.b16 %v187
    %v690 = vunpack.c.l.b16 %v188
    %v691 = vunpack.c.l.b16 %v189
    %v692 = vunpack.c.l.b16 %v190
    %v693 = vunpack.c.l.b16 %v191
    %v694 = vunpack.c.l.b16 %v192
    %v695 = vunpack.c.l.b16 %v193
    %v696 = vunpack.c.l.b16 %v194
    %v697 = vunpack.c.l.b16 %v195
    %v698 = vunpack.c.l.b16 %v196
    %v699 = vunpack.c.l.b16 %v197
    %v700 = vunpack.c.l.b16 %v198
    %v701 = vunpack.c.l.b16 %v199
    %v702 = vunpack.c.l.b16 %v200
    %v703 = vunpack.c.l.b16 %v201
    %v704 = vunpack.c.l.b16 %v202
    %v705 = vunpack.c.l.b16 %v203
    %v706 = vunpack.c.l.b16 %v204
    %v707 = vunpack.c.l.b16 %v205
    %v708 = vunpack.c.l.b16 %v206
    %v709 = vunpack.c.l.b16 %v207
    %v710 = vunpack.c.l.b16 %v208
    %v711 = vunpack.c.l.b16 %v209
    %v712 = vunpack.c.l.b16 %v210
    %v713 = vunpack.c.l.b16 %v211
    %v714 = vunpack.c.l.b16 %v212
    %v715 = vunpack.c.l.b16 %v213
    %v716 = vunpack.c.l.b16 %v214
    %v717 = vunpack.c.l.b16 %v215
    %v718 = vunpack.c.l.b16 %v216
    %v719 = vunpack.c.l.b16 %v217
    %v720 = vunpack.c.l.b16 %v218
    %v721 = vunpack.c.l.b16 %v219
    %v722 = vunpack.c.l.b16 %v220
    %v723 = vunpack.c.l.b16 %v221
    %v724 = vunpack.c.l.b16 %v222
    %v725 = vunpack.c.l.b16 %v223
    %v726 = vunpack.c.l.b16 %v224
    %v727 = vunpack.c.l.b16 %v225
    %v728 = vunpack.c.l.b16 %v226
    %v729 = vunpack.c.l.b16 %v227
    %v730 = vunpack.c.l.b16 %v228
    %v731 = vunpack.c.l.b16 %v229
    %v732 = vunpack.c.l.b16 %v230
    %v733 = vunpack.c.l.b16 %v231
    %v734 = vunpack.c.l.b16 %v232
    %v735 = vunpack.c.l.b16 %v233
    %v736 = vunpack.c.l.b16 %v234
    %v737 = vunpack.c.l.b16 %v235
    %v738 = vunpack.c.l.b16 %v236
    %v739 = vunpack.c.l.b16 %v237
    %v740 = vunpack.c.l.b16 %v238
    %v741 = vunpack.c.l.b16 %v239
    %v742 = vunpack.c.l.b16 %v240
    %v743 = vunpack.c.l.b16 %v241
    %v744 = vunpack.c.l.b16 %v242
    %v745 = vunpack.c.l.b16 %v243
    %v746 = vunpack.c.l.b16 %v244
    %v747 = vunpack.c.l.b16 %v245
    %v748 = vunpack.c.l.b16 %v246
    %v749 = vunpack.c.l.b16 %v247
    %v750 = vunpack.c.l.b16 %v248
    %v751 = vunpack.c.l.b16 %v249
    %v752 = vunpack.c.l.b16 %v250
    %v753 = vunpack.c.l.b16 %v251
    %v754 = vunpack.c.l.b16 %v252
    %v755 = vunpack.c.l.b16 %v253
    %v756 = vunpack.c.l.b16 %v254
    %v757 = vunpack.c.l.b16 %v255
    %v758 = vunpack.c.l.b16 %v256
    %v759 = vunpack.c.l.b16 %v257
    %v760 = vunpack.c.l.b16 %v258
    %v761 = vunpack.c.l.b16 %v259
    %v762 = vunpack.c.l.b16 %v260
    %v763 = vunpack.c.l.b16 %v261
    %v764 = vunpack.c.l.b16 %v262
    %v765 = vunpack.c.l.b16 %v263
    %v766 = vunpack.c.l.b16 %v264
    %v767 = vunpack.c.l.b16 %v265
    %v768 = vunpack.c.l.b16 %v266
    %v769 = vunpack.c.l.b16 %v267
    %v770 = vunpack.c.l.b16 %v268
    %v771 = vunpack.c.l.b16 %v269
    %v772 = vunpack.c.l.b16 %v270
    %v773 = vunpack.c.l.b16 %v271
    %v774 = vunpack.c.l.b16 %v272
    %v775 = vunpack.c.l.b16 %v273
    %v776 = vunpack.c.l.b16 %v274
    %v777 = vunpack.c.l.b16 %v275
    %v778 = vunpack.c.l.b16 %v276
    %v779 = vunpack.c.l.b16 %v277
    %v780 = vunpack.c.l.b16 %v278
    %v781 = vunpack.c.l.b16 %v279
    %v782 = vunpack.c.l.b16 %v280
    %v783 = vunpack.c.l.b16 %v281
    %v784 = vunpack.c.l.b16 %v282
    %v785 = vunpack.c.l.b16 %v283
    %v786 = vunpack.c.l.b16 %v284
    %v787 = vunpack.c.l.b16 %v285
    %v788 = vunpack.c.l.b16 %v286
    %v789 = vunpack.c.l.b16 %v287
    %v790 = vunpack.c.l.b16 %v288
    %v791 = vunpack.c.l.b16 %v289
    %v792 = vunpack.c.l.b16 %v290
    %v793 = vunpack.c.l.b16 %v291
    %v794 = vunpack.c.l.b16 %v292
    %v795 = vunpack.c.l.b16 %v293
    %v796 = vunpack.c.l.b16 %v294
    %v797 = vunpack.c.l.b16 %v295
    %v798 = vunpack.c.l.b16 %v296
    %v799 = vunpack.c.l.b16 %v297
    %v800 = vunpack.c.l.b16 %v298
    %v801 = vunpack.c.l.b16 %v299
    %v802 = vunpack.c.l.b16 %v300
    %v803 = vunpack.c.l.b16 %v301
    %v804 = vunpack.c.l.b16 %v302
    %v805 = vunpack.c.l.b16 %v303
    %v806 = vunpack.c.l.b16 %v304
    %v807 = vunpack.c.l.b16 %v305
    %v808 = vunpack.c.l.b16 %v306
    %v809 = vunpack.c.l.b16 %v307
    %v810 = vunpack.c.l.b16 %v308
    %v811 = vunpack.c.l.b16 %v309
    %v812 = vunpack.c.l.b16 %v310
    %v813 = vunpack.c.l.b16 %v311
    %v814 = vunpack.c.l.b16 %v312
    %v815 = vunpack.c.l.b16 %v313
    %v816 = vunpack.c.l.b16 %v314
    %v817 = vunpack.c.l.b16 %v315
    %v818 = vunpack.c.l.b16 %v316
    %v819 = vunpack.c.l.b16 %v317
    %v820 = vunpack.c.l.b16 %v318
    %v821 = vunpack.c.l.b16 %v319
    %v822 = vunpack.c.l.b16 %v320
    %v823 = vunpack.c.l.b16 %v321
    %v824 = vunpack.c.l.b16 %v322
    %v825 = vunpack.c.l.b16 %v323
    %v826 = vunpack.c.l.b16 %v324
    %v827 = vunpack.c.l.b16 %v325
    %v828 = vunpack.c.l.b16 %v326
    %v829 = vunpack.c.l.b16 %v327
    %v830 = vunpack.c.l.b16 %v328
    %v831 = vunpack.c.l.b16 %v329
    %v832 = vunpack.c.l.b16 %v330
    %v833 = vunpack.c.l.b16 %v331
    %v834 = vunpack.c.l.b16 %v332
    %v835 = vunpack.c.l.b16 %v333
    %v836 = vunpack.c.l.b16 %v334
    %v837 = vunpack.c.l.b16 %v335
    %v838 = vunpack.c.l.b16 %v336
    %v839 = vunpack.c.l.b16 %v337
    %v840 = vunpack.c.l.b16 %v338
    %v841 = vunpack.c.l.b16 %v339
    %v842 = vunpack.c.l.b16 %v340
    %v843 = vunpack.c.l.b16 %v341
    %v844 = vunpack.c.l.b16 %v342
    %v845 = vunpack.c.l.b16 %v343
    %v846 = vunpack.c.l.b16 %v344
    %v847 = vunpack.c.l.b16 %v345
    %v848 = vunpack.c.l.b16 %v346
    %v849 = vunpack.c.l.b16 %v347
    %v850 = vunpack.c.l.b16 %v348
    %v851 = vunpack.c.l.b16 %v349
    %v852 = vunpack.c.l.b16 %v350
    %v853 = vunpack.c.l.b16 %v351
    %v854 = vunpack.c.l.b16 %v352
    %v855 = vunpack.c.l.b16 %v353
    %v856 = vunpack.c.l.b16 %v354
    %v857 = vunpack.c.l.b16 %v355
    %v858 = vunpack.c.l.b16 %v356
    %v859 = vunpack.c.l.b16 %v357
    %v860 = vunpack.c.l.b16 %v358
    %v861 = vunpack.c.l.b16 %v359
    %v862 = vunpack.c.l.b16 %v360
    %v863 = vunpack.c.l.b16 %v361
    %v864 = vunpack.c.l.b16 %v362
    %v865 = vunpack.c.l.b16 %v363
    %v866 = vunpack.c.l.b16 %v364
    %v867 = vunpack.c.l.b16 %v365
    %v868 = vunpack.c.l.b16 %v366
    %v869 = vunpack.c.l.b16 %v367
    %v870 = vunpack.c.l.b16 %v368
    %v871 = vunpack.c.l.b16 %v369
    %v872 = vunpack.c.l.b16 %v370
    %v873 = vunpack.c.l.b16 %v371
    %v874 = vunpack.c.l.b16 %v372
    %v875 = vunpack.c.l.b16 %v373
    %v876 = vunpack.c.l.b16 %v374
    %v877 = vunpack.c.l.b16 %v375
    %v878 = vunpack.c.l.b16 %v376
    %v879 = vunpack.c.l.b16 %v377
    %v880 = vunpack.c.l.b16 %v378
    %v881 = vpack.c.b16 %v657, %v656
    %v882 = vpack.c.b16 %v659, %v658
    %v883 = vpack.c.b16 %v661, %v660
    %v884 = vpack.c.b16 %v663, %v662
    %v885 = vpack.c.b16 %v665, %v664
    %v886 = vpack.c.b16 %v667, %v666
    %v887 = vpack.c.b16 %v669, %v668
    %v888 = vpack.c.b16 %v671, %v670
    %v889 = vpack.c.b16 %v673, %v672
    %v890 = vpack.c.b16 %v675, %v674
    %v891 = vpack.c.b16 %v677, %v676
    %v892 = vpack.c.b16 %v679, %v678
    %v893 = vpack.c.b16 %v681, %v680
    %v894 = vpack.c.b16 %v683, %v682
    %v895 = vpack.c.b16 %v685, %v684
    %v896 = vpack.c.b16 %v687, %v686
    %v897 = vpack.c.b16 %v689, %v688
    %v898 = vpack.c.b16 %v691, %v690
    %v899 = vpack.c.b16 %v693, %v692
    %v900 = vpack.c.b16 %v695, %v694
    %v901 = vpack.c.b16 %v697, %v696
    %v902 = vpack.c.b16 %v699, %v698
    %v903 = vpack.c.b16 %v701, %v700
    %v904 = vpack.c.b16 %v703, %v702
    %v905 = vpack.c.b16 %v705, %v704
    %v906 = vpack.c.b16 %v707, %v706
    %v907 = vpack.c.b16 %v709, %v708
    %v908 = vpack.c.b16 %v711, %v710
    %v909 = vpack.c.b16 %v713, %v712
    %v910 = vpack.c.b16 %v715, %v714
    %v911 = vpack.c.b16 %v717, %v716
    %v912 = vpack.c.b16 %v719, %v718
    %v913 = vpack.c.b16 %v721, %v720
    %v914 = vpack.c.b16 %v723, %v722
    %v915 = vpack.c.b16 %v725, %v724
    %v916 = vpack.c.b16 %v727, %v726
    %v917 = vpack.c.b16 %v729, %v728
    %v918 = vpack.c.b16 %v731, %v730
    %v919 = vpack.c.b16 %v733, %v732
    %v920 = vpack.c.b16 %v735, %v734
    %v921 = vpack.c.b16 %v737, %v736
    %v922 = vpack.c.b16 %v739, %v738
    %v923 = vpack.c.b16 %v741, %v740
    %v924 = vpack.c.b16 %v743, %v742
    %v925 = vpack.c.b16 %v745, %v744
    %v926 = vpack.c.b16 %v747, %v746
    %v927 = vpack.c.b16 %v749, %v748
    %v928 = vpack.c.b16 %v751, %v750
    %v929 = vpack.c.b16 %v753, %v752
    %v930 = vpack.c.b16 %v755, %v754
    %v931 = vpack.c.b16 %v757, %v756
    %v932 = vpack.c.b16 %v759, %v758
    %v933 = vpack.c.b16 %v761, %v760
    %v934 = vpack.c.b16 %v763, %v762
    %v935 = vpack.c.b16 %v765, %v764
    %v936 = vpack.c.b16 %v767, %v766
    %v937 = vpack.c.b16 %v769, %v768
    %v938 = vpack.c.b16 %v771, %v770
    %v939 = vpack.c.b16 %v773, %v772
    %v940 = vpack.c.b16 %v775, %v774
    %v941 = vpack.c.b16 %v777, %v776
    %v942 = vpack.c.b16 %v779, %v778
    %v943 = vpack.c.b16 %v781, %v780
    %v944 = vpack.c.b16 %v783, %v782
    %v945 = vpack.c.b16 %v785, %v784
    %v946 = vpack.c.b16 %v787, %v786
    %v947 = vpack.c.b16 %v789, %v788
    %v948 = vpack.c.b16 %v791, %v790
    %v949 = vpack.c.b16 %v793, %v792
    %v950 = vpack.c.b16 %v795, %v794
    %v951 = vpack.c.b16 %v797, %v796
    %v952 = vpack.c.b16 %v799, %v798
    %v953 = vpack.c.b16 %v801, %v800
    %v954 = vpack.c.b16 %v803, %v802
    %v955 = vpack.c.b16 %v805, %v804
    %v956 = vpack.c.b16 %v807, %v806
    %v957 = vpack.c.b16 %v809, %v808
    %v958 = vpack.c.b16 %v811, %v810
    %v959 = vpack.c.b16 %v813, %v812
    %v960 = vpack.c.b16 %v815, %v814
    %v961 = vpack.c.b16 %v817, %v816
    %v962 = vpack.c.b16 %v819, %v818
    %v963 = vpack.c.b16 %v821, %v820
    %v964 = vpack.c.b16 %v823, %v822
    %v965 = vpack.c.b16 %v825, %v824
    %v966 = vpack.c.b16 %v827, %v826
    %v967 = vpack.c.b16 %v829, %v828
    %v968 = vpack.c.b16 %v831, %v830
    %v969 = vpack.c.b16 %v833, %v832
    %v970 = vpack.c.b16 %v835, %v834
    %v971 = vpack.c.b16 %v837, %v836
    %v972 = vpack.c.b16 %v839, %v838
    %v973 = vpack.c.b16 %v841, %v840
    %v974 = vpack.c.b16 %v843, %v842
    %v975 = vpack.c.b16 %v845, %v844
    %v976 = vpack.c.b16 %v847, %v846
    %v977 = vpack.c.b16 %v849, %v848
    %v978 = vpack.c.b16 %v851, %v850
    %v979 = vpack.c.b16 %v853, %v852
    %v980 = vpack.c.b16 %v855, %v854
    %v981 = vpack.c.b16 %v857, %v856
    %v982 = vpack.c.b16 %v859, %v858
    %v983 = vpack.c.b16 %v861, %v860
    %v984 = vpack.c.b16 %v863, %v862
    %v985 = vpack.c.b16 %v865, %v864
    %v986 = vpack.c.b16 %v867, %v866
    %v987 = vpack.c.b16 %v869, %v868
    %v988 = vpack.c.b16 %v871, %v870
    %v989 = vpack.c.b16 %v873, %v872
    %v990 = vpack.c.b16 %v875, %v874
    %v991 = vpack.c.b16 %v877, %v876
    %v992 = vpack.c.b16 %v879, %v878
    %v993 = vpack.c.b16 %v880, %v880
    %vm1106 = vcmask 64512
    %v1108 = vsel %vm1106, %v416, 0
    %vm1110 = vcmask 1043456
    %v1112 = vsel %vm1110, %v993, 0
    %1114 = vmatprep.subr.bf16.mxu0 0
    %1115 = vmatpush1.bf16.msra.mxu0 %v881
    %1116 = vmatprep.subr.bf16.mxu0 0
    %1117 = vmatpush1.bf16.msra.mxu0 %v882
    %1118 = vmatprep.subr.bf16.mxu0 0
    %1119 = vmatpush1.bf16.msra.mxu0 %v883
    %1120 = vmatprep.subr.bf16.mxu0 0
    %1121 = vmatpush1.bf16.msra.mxu0 %v884
    %1122 = vmatprep.subr.bf16.mxu0 0
    %1123 = vmatpush1.bf16.msra.mxu0 %v885
    %1124 = vmatprep.subr.bf16.mxu0 0
    %1125 = vmatpush1.bf16.msra.mxu0 %v886
    %1126 = vmatprep.subr.bf16.mxu0 0
    %1127 = vmatpush1.bf16.msra.mxu0 %v887
    %1128 = vmatprep.subr.bf16.mxu0 0
    %1129 = vmatpush1.bf16.msra.mxu0 %v888
    %1130 = vmatprep.subr.bf16.mxu0 0
    %1131 = vmatpush1.bf16.msra.mxu0 %v889
    %1132 = vmatprep.subr.bf16.mxu0 0
    %1133 = vmatpush1.bf16.msra.mxu0 %v890
    %1134 = vmatprep.subr.bf16.mxu0 0
    %1135 = vmatpush1.bf16.msra.mxu0 %v891
    %1136 = vmatprep.subr.bf16.mxu0 0
    %1137 = vmatpush1.bf16.msra.mxu0 %v892
    %1138 = vmatprep.subr.bf16.mxu0 0
    %1139 = vmatpush1.bf16.msra.mxu0 %v893
    %1140 = vmatprep.subr.bf16.mxu0 0
    %1141 = vmatpush1.bf16.msra.mxu0 %v894
    %1142 = vmatprep.subr.bf16.mxu0 0
    %1143 = vmatpush1.bf16.msra.mxu0 %v895
    %1144 = vmatprep.subr.bf16.mxu0 0
    %1145 = vmatpush1.bf16.msra.mxu0 %v896
    %1146 = vmatprep.mubr.bf16.mxu0 %v403
    %1147 = vmatmul.mubr.bf16.gmra.mrb[0].mxu0 %v402
    %v1148 = vpop.f32.mrb[0].mxu0
    %v1149 = vadd.f32 0.0, %v1148
    %v1150 = vpop.f32.mrb[0].mxu0
    %v1151 = vpop.f32.mrb[0].mxu0
    %v1152 = vpop.f32.mrb[0].mxu0
    %1153 = vdwg.mxu0
    %1154 = vmatprep.subr.bf16.mxu0 0
    %1155 = vmatpush1.bf16.msra.mxu0 %v897
    %1156 = vmatprep.subr.bf16.mxu0 0
    %1157 = vmatpush1.bf16.msra.mxu0 %v898
    %1158 = vmatprep.subr.bf16.mxu0 0
    %1159 = vmatpush1.bf16.msra.mxu0 %v899
    %1160 = vmatprep.subr.bf16.mxu0 0
    %1161 = vmatpush1.bf16.msra.mxu0 %v900
    %1162 = vmatprep.subr.bf16.mxu0 0
    %1163 = vmatpush1.bf16.msra.mxu0 %v901
    %1164 = vmatprep.subr.bf16.mxu0 0
    %1165 = vmatpush1.bf16.msra.mxu0 %v902
    %1166 = vmatprep.subr.bf16.mxu0 0
    %1167 = vmatpush1.bf16.msra.mxu0 %v903
    %1168 = vmatprep.subr.bf16.mxu0 0
    %1169 = vmatpush1.bf16.msra.mxu0 %v904
    %1170 = vmatprep.subr.bf16.mxu0 0
    %1171 = vmatpush1.bf16.msra.mxu0 %v905
    %1172 = vmatprep.subr.bf16.mxu0 0
    %1173 = vmatpush1.bf16.msra.mxu0 %v906
    %1174 = vmatprep.subr.bf16.mxu0 0
    %1175 = vmatpush1.bf16.msra.mxu0 %v907
    %1176 = vmatprep.subr.bf16.mxu0 0
    %1177 = vmatpush1.bf16.msra.mxu0 %v908
    %1178 = vmatprep.subr.bf16.mxu0 0
    %1179 = vmatpush1.bf16.msra.mxu0 %v909
    %1180 = vmatprep.subr.bf16.mxu0 0
    %1181 = vmatpush1.bf16.msra.mxu0 %v910
    %1182 = vmatprep.subr.bf16.mxu0 0
    %1183 = vmatpush1.bf16.msra.mxu0 %v911
    %1184 = vmatprep.subr.bf16.mxu0 0
    %1185 = vmatpush1.bf16.msra.mxu0 %v912
    %1186 = vmatprep.mubr.bf16.mxu0 %v405
    %1187 = vmatmul.mubr.bf16.gmra.mrb[0].mxu0 %v404
    %v1188 = vpop.f32.mrb[0].mxu0
    %v1189 = vadd.f32 %v1149, %v1188
    %v1190 = vpop.f32.mrb[0].mxu0
    %v1191 = vpop.f32.mrb[0].mxu0
    %v1192 = vpop.f32.mrb[0].mxu0
    %1193 = vdwg.mxu0
    %1194 = vmatprep.subr.bf16.mxu0 0
    %1195 = vmatpush1.bf16.msra.mxu0 %v913
    %1196 = vmatprep.subr.bf16.mxu0 0
    %1197 = vmatpush1.bf16.msra.mxu0 %v914
    %1198 = vmatprep.subr.bf16.mxu0 0
    %1199 = vmatpush1.bf16.msra.mxu0 %v915
    %1200 = vmatprep.subr.bf16.mxu0 0
    %1201 = vmatpush1.bf16.msra.mxu0 %v916
    %1202 = vmatprep.subr.bf16.mxu0 0
    %1203 = vmatpush1.bf16.msra.mxu0 %v917
    %1204 = vmatprep.subr.bf16.mxu0 0
    %1205 = vmatpush1.bf16.msra.mxu0 %v918
    %1206 = vmatprep.subr.bf16.mxu0 0
    %1207 = vmatpush1.bf16.msra.mxu0 %v919
    %1208 = vmatprep.subr.bf16.mxu0 0
    %1209 = vmatpush1.bf16.msra.mxu0 %v920
    %1210 = vmatprep.subr.bf16.mxu0 0
    %1211 = vmatpush1.bf16.msra.mxu0 %v921
    %1212 = vmatprep.subr.bf16.mxu0 0
    %1213 = vmatpush1.bf16.msra.mxu0 %v922
    %1214 = vmatprep.subr.bf16.mxu0 0
    %1215 = vmatpush1.bf16.msra.mxu0 %v923
    %1216 = vmatprep.subr.bf16.mxu0 0
    %1217 = vmatpush1.bf16.msra.mxu0 %v924
    %1218 = vmatprep.subr.bf16.mxu0 0
    %1219 = vmatpush1.bf16.msra.mxu0 %v925
    %1220 = vmatprep.subr.bf16.mxu0 0
    %1221 = vmatpush1.bf16.msra.mxu0 %v926
    %1222 = vmatprep.subr.bf16.mxu0 0
    %1223 = vmatpush1.bf16.msra.mxu0 %v927
    %1224 = vmatprep.subr.bf16.mxu0 0
    %1225 = vmatpush1.bf16.msra.mxu0 %v928
    %1226 = vmatprep.mubr.bf16.mxu0 %v407
    %1227 = vmatmul.mubr.bf16.gmra.mrb[0].mxu0 %v406
    %v1228 = vpop.f32.mrb[0].mxu0
    %v1229 = vadd.f32 %v1189, %v1228
    %v1230 = vpop.f32.mrb[0].mxu0
    %v1231 = vpop.f32.mrb[0].mxu0
    %v1232 = vpop.f32.mrb[0].mxu0
    %1233 = vdwg.mxu0
    %1234 = vmatprep.subr.bf16.mxu0 0
    %1235 = vmatpush1.bf16.msra.mxu0 %v929
    %1236 = vmatprep.subr.bf16.mxu0 0
    %1237 = vmatpush1.bf16.msra.mxu0 %v930
    %1238 = vmatprep.subr.bf16.mxu0 0
    %1239 = vmatpush1.bf16.msra.mxu0 %v931
    %1240 = vmatprep.subr.bf16.mxu0 0
    %1241 = vmatpush1.bf16.msra.mxu0 %v932
    %1242 = vmatprep.subr.bf16.mxu0 0
    %1243 = vmatpush1.bf16.msra.mxu0 %v933
    %1244 = vmatprep.subr.bf16.mxu0 0
    %1245 = vmatpush1.bf16.msra.mxu0 %v934
    %1246 = vmatprep.subr.bf16.mxu0 0
    %1247 = vmatpush1.bf16.msra.mxu0 %v935
    %1248 = vmatprep.subr.bf16.mxu0 0
    %1249 = vmatpush1.bf16.msra.mxu0 %v936
    %1250 = vmatprep.subr.bf16.mxu0 0
    %1251 = vmatpush1.bf16.msra.mxu0 %v937
    %1252 = vmatprep.subr.bf16.mxu0 0
    %1253 = vmatpush1.bf16.msra.mxu0 %v938
    %1254 = vmatprep.subr.bf16.mxu0 0
    %1255 = vmatpush1.bf16.msra.mxu0 %v939
    %1256 = vmatprep.subr.bf16.mxu0 0
    %1257 = vmatpush1.bf16.msra.mxu0 %v940
    %1258 = vmatprep.subr.bf16.mxu0 0
    %1259 = vmatpush1.bf16.msra.mxu0 %v941
    %1260 = vmatprep.subr.bf16.mxu0 0
    %1261 = vmatpush1.bf16.msra.mxu0 %v942
    %1262 = vmatprep.subr.bf16.mxu0 0
    %1263 = vmatpush1.bf16.msra.mxu0 %v943
    %1264 = vmatprep.subr.bf16.mxu0 0
    %1265 = vmatpush1.bf16.msra.mxu0 %v944
    %1266 = vmatprep.mubr.bf16.mxu0 %v409
    %1267 = vmatmul.mubr.bf16.gmra.mrb[0].mxu0 %v408
    %v1268 = vpop.f32.mrb[0].mxu0
    %v1269 = vadd.f32 %v1229, %v1268
    %v1270 = vpop.f32.mrb[0].mxu0
    %v1271 = vpop.f32.mrb[0].mxu0
    %v1272 = vpop.f32.mrb[0].mxu0
    %1273 = vdwg.mxu0
    %1274 = vmatprep.subr.bf16.mxu0 0
    %1275 = vmatpush1.bf16.msra.mxu0 %v945
    %1276 = vmatprep.subr.bf16.mxu0 0
    %1277 = vmatpush1.bf16.msra.mxu0 %v946
    %1278 = vmatprep.subr.bf16.mxu0 0
    %1279 = vmatpush1.bf16.msra.mxu0 %v947
    %1280 = vmatprep.subr.bf16.mxu0 0
    %1281 = vmatpush1.bf16.msra.mxu0 %v948
    %1282 = vmatprep.subr.bf16.mxu0 0
    %1283 = vmatpush1.bf16.msra.mxu0 %v949
    %1284 = vmatprep.subr.bf16.mxu0 0
    %1285 = vmatpush1.bf16.msra.mxu0 %v950
    %1286 = vmatprep.subr.bf16.mxu0 0
    %1287 = vmatpush1.bf16.msra.mxu0 %v951
    %1288 = vmatprep.subr.bf16.mxu0 0
    %1289 = vmatpush1.bf16.msra.mxu0 %v952
    %1290 = vmatprep.subr.bf16.mxu0 0
    %1291 = vmatpush1.bf16.msra.mxu0 %v953
    %1292 = vmatprep.subr.bf16.mxu0 0
    %1293 = vmatpush1.bf16.msra.mxu0 %v954
    %1294 = vmatprep.subr.bf16.mxu0 0
    %1295 = vmatpush1.bf16.msra.mxu0 %v955
    %1296 = vmatprep.subr.bf16.mxu0 0
    %1297 = vmatpush1.bf16.msra.mxu0 %v956
    %1298 = vmatprep.subr.bf16.mxu0 0
    %1299 = vmatpush1.bf16.msra.mxu0 %v957
    %1300 = vmatprep.subr.bf16.mxu0 0
    %1301 = vmatpush1.bf16.msra.mxu0 %v958
    %1302 = vmatprep.subr.bf16.mxu0 0
    %1303 = vmatpush1.bf16.msra.mxu0 %v959
    %1304 = vmatprep.subr.bf16.mxu0 0
    %1305 = vmatpush1.bf16.msra.mxu0 %v960
    %1306 = vmatprep.mubr.bf16.mxu0 %v411
    %1307 = vmatmul.mubr.bf16.gmra.mrb[0].mxu0 %v410
    %v1308 = vpop.f32.mrb[0].mxu0
    %v1309 = vadd.f32 %v1269, %v1308
    %v1310 = vpop.f32.mrb[0].mxu0
    %v1311 = vpop.f32.mrb[0].mxu0
    %v1312 = vpop.f32.mrb[0].mxu0
    %1313 = vdwg.mxu0
    %1314 = vmatprep.subr.bf16.mxu0 0
    %1315 = vmatpush1.bf16.msra.mxu0 %v961
    %1316 = vmatprep.subr.bf16.mxu0 0
    %1317 = vmatpush1.bf16.msra.mxu0 %v962
    %1318 = vmatprep.subr.bf16.mxu0 0
    %1319 = vmatpush1.bf16.msra.mxu0 %v963
    %1320 = vmatprep.subr.bf16.mxu0 0
    %1321 = vmatpush1.bf16.msra.mxu0 %v964
    %1322 = vmatprep.subr.bf16.mxu0 0
    %1323 = vmatpush1.bf16.msra.mxu0 %v965
    %1324 = vmatprep.subr.bf16.mxu0 0
    %1325 = vmatpush1.bf16.msra.mxu0 %v966
    %1326 = vmatprep.subr.bf16.mxu0 0
    %1327 = vmatpush1.bf16.msra.mxu0 %v967
    %1328 = vmatprep.subr.bf16.mxu0 0
    %1329 = vmatpush1.bf16.msra.mxu0 %v968
    %1330 = vmatprep.subr.bf16.mxu0 0
    %1331 = vmatpush1.bf16.msra.mxu0 %v969
    %1332 = vmatprep.subr.bf16.mxu0 0
    %1333 = vmatpush1.bf16.msra.mxu0 %v970
    %1334 = vmatprep.subr.bf16.mxu0 0
    %1335 = vmatpush1.bf16.msra.mxu0 %v971
    %1336 = vmatprep.subr.bf16.mxu0 0
    %1337 = vmatpush1.bf16.msra.mxu0 %v972
    %1338 = vmatprep.subr.bf16.mxu0 0
    %1339 = vmatpush1.bf16.msra.mxu0 %v973
    %1340 = vmatprep.subr.bf16.mxu0 0
    %1341 = vmatpush1.bf16.msra.mxu0 %v974
    %1342 = vmatprep.subr.bf16.mxu0 0
    %1343 = vmatpush1.bf16.msra.mxu0 %v975
    %1344 = vmatprep.subr.bf16.mxu0 0
    %1345 = vmatpush1.bf16.msra.mxu0 %v976
    %1346 = vmatprep.mubr.bf16.mxu0 %v413
    %1347 = vmatmul.mubr.bf16.gmra.mrb[0].mxu0 %v412
    %v1348 = vpop.f32.mrb[0].mxu0
    %v1349 = vadd.f32 %v1309, %v1348
    %v1350 = vpop.f32.mrb[0].mxu0
    %v1351 = vpop.f32.mrb[0].mxu0
    %v1352 = vpop.f32.mrb[0].mxu0
    %1353 = vdwg.mxu0
    %1354 = vmatprep.subr.bf16.mxu0 0
    %1355 = vmatpush1.bf16.msra.mxu0 %v977
    %1356 = vmatprep.subr.bf16.mxu0 0
    %1357 = vmatpush1.bf16.msra.mxu0 %v978
    %1358 = vmatprep.subr.bf16.mxu0 0
    %1359 = vmatpush1.bf16.msra.mxu0 %v979
    %1360 = vmatprep.subr.bf16.mxu0 0
    %1361 = vmatpush1.bf16.msra.mxu0 %v980
    %1362 = vmatprep.subr.bf16.mxu0 0
    %1363 = vmatpush1.bf16.msra.mxu0 %v981
    %1364 = vmatprep.subr.bf16.mxu0 0
    %1365 = vmatpush1.bf16.msra.mxu0 %v982
    %1366 = vmatprep.subr.bf16.mxu0 0
    %1367 = vmatpush1.bf16.msra.mxu0 %v983
    %1368 = vmatprep.subr.bf16.mxu0 0
    %1369 = vmatpush1.bf16.msra.mxu0 %v984
    %1370 = vmatprep.subr.bf16.mxu0 0
    %1371 = vmatpush1.bf16.msra.mxu0 %v985
    %1372 = vmatprep.subr.bf16.mxu0 0
    %1373 = vmatpush1.bf16.msra.mxu0 %v986
    %1374 = vmatprep.subr.bf16.mxu0 0
    %1375 = vmatpush1.bf16.msra.mxu0 %v987
    %1376 = vmatprep.subr.bf16.mxu0 0
    %1377 = vmatpush1.bf16.msra.mxu0 %v988
    %1378 = vmatprep.subr.bf16.mxu0 0
    %1379 = vmatpush1.bf16.msra.mxu0 %v989
    %1380 = vmatprep.subr.bf16.mxu0 0
    %1381 = vmatpush1.bf16.msra.mxu0 %v990
    %1382 = vmatprep.subr.bf16.mxu0 0
    %1383 = vmatpush1.bf16.msra.mxu0 %v991
    %1384 = vmatprep.subr.bf16.mxu0 0
    %1385 = vmatpush1.bf16.msra.mxu0 %v992
    %1386 = vmatprep.mubr.bf16.mxu0 %v415
    %1387 = vmatmul.mubr.bf16.gmra.mrb[0].mxu0 %v414
    %v1388 = vpop.f32.mrb[0].mxu0
    %v1389 = vadd.f32 %v1349, %v1388
    %v1390 = vpop.f32.mrb[0].mxu0
    %v1391 = vpop.f32.mrb[0].mxu0
    %v1392 = vpop.f32.mrb[0].mxu0
    %1393 = vdwg.mxu0
    %1394 = vmatprep.subr.bf16.mxu0 0
    %1395 = vmatpush1.bf16.msra.mxu0 %v1112
    %1396 = vmatprep.subr.bf16.mxu0 0
    %1397 = vmatpush1.bf16.msra.mxu0 0
    %1398 = vmatprep.subr.bf16.mxu0 0
    %1399 = vmatpush1.bf16.msra.mxu0 0
    %1400 = vmatprep.subr.bf16.mxu0 0
    %1401 = vmatpush1.bf16.msra.mxu0 0
    %1402 = vmatprep.subr.bf16.mxu0 0
    %1403 = vmatpush1.bf16.msra.mxu0 0
    %1404 = vmatprep.subr.bf16.mxu0 0
    %1405 = vmatpush1.bf16.msra.mxu0 0
    %1406 = vmatprep.subr.bf16.mxu0 0
    %1407 = vmatpush1.bf16.msra.mxu0 0
    %1408 = vmatprep.subr.bf16.mxu0 0
    %1409 = vmatpush1.bf16.msra.mxu0 0
    %1410 = vmatprep.subr.bf16.mxu0 0
    %1411 = vmatpush1.bf16.msra.mxu0 0
    %1412 = vmatprep.subr.bf16.mxu0 0
    %1413 = vmatpush1.bf16.msra.mxu0 0
    %1414 = vmatprep.subr.bf16.mxu0 0
    %1415 = vmatpush1.bf16.msra.mxu0 0
    %1416 = vmatprep.subr.bf16.mxu0 0
    %1417 = vmatpush1.bf16.msra.mxu0 0
    %1418 = vmatprep.subr.bf16.mxu0 0
    %1419 = vmatpush1.bf16.msra.mxu0 0
    %1420 = vmatprep.subr.bf16.mxu0 0
    %1421 = vmatpush1.bf16.msra.mxu0 0
    %1422 = vmatprep.subr.bf16.mxu0 0
    %1423 = vmatpush1.bf16.msra.mxu0 0
    %1424 = vmatprep.subr.bf16.mxu0 0
    %1425 = vmatpush1.bf16.msra.mxu0 0
    %1426 = vmatprep.mubr.bf16.mxu0 0
    %1427 = vmatmul.mubr.bf16.gmra.mrb[0].mxu0 %v1108
    %v1428 = vpop.f32.mrb[0].mxu0
    %v1429 = vadd.f32 %v1389, %v1428
    %v1430 = vpop.f32.mrb[0].mxu0
    %v1431 = vpop.f32.mrb[0].mxu0
    %v1432 = vpop.f32.mrb[0].mxu0
    %1433 = vdwg.mxu0
    %v1436 = vunpack.c.l.b16 %v80
    %v1437 = vunpack.c.h.b16 %v80
    %v1438 = vunpack.c.l.b16 %v81
    %v1439 = vunpack.c.h.b16 %v81
    %v1440 = vpack.c.b16 %v1436, %v1436
    %v1441 = vpack.c.b16 %v1437, %v1437
    %v1442 = vpack.c.b16 %v1438, %v1438
    %v1443 = vpack.c.b16 %v1439, %v1439
    %v1512 = vunpack.c.l.b16 %v82
    %v1513 = vunpack.c.l.b16 %v83
    %v1514 = vunpack.c.l.b16 %v84
    %v1515 = vunpack.c.l.b16 %v85
    %v1516 = vunpack.c.l.b16 %v86
    %v1517 = vunpack.c.l.b16 %v87
    %v1518 = vunpack.c.l.b16 %v88
    %v1519 = vunpack.c.l.b16 %v89
    %v1520 = vunpack.c.l.b16 %v90
    %v1521 = vunpack.c.l.b16 %v91
    %v1522 = vunpack.c.l.b16 %v92
    %v1523 = vunpack.c.l.b16 %v93
    %v1524 = vunpack.c.l.b16 %v94
    %v1525 = vunpack.c.l.b16 %v95
    %v1526 = vunpack.c.l.b16 %v96
    %v1527 = vunpack.c.l.b16 %v97
    %v1528 = vunpack.c.l.b16 %v98
    %v1529 = vunpack.c.l.b16 %v99
    %v1530 = vunpack.c.l.b16 %v100
    %v1531 = vunpack.c.l.b16 %v101
    %v1532 = vunpack.c.l.b16 %v102
    %v1533 = vunpack.c.l.b16 %v103
    %v1534 = vunpack.c.l.b16 %v104
    %v1535 = vunpack.c.l.b16 %v105
    %v1536 = vunpack.c.l.b16 %v106
    %v1537 = vunpack.c.l.b16 %v107
    %v1538 = vunpack.c.l.b16 %v108
    %v1539 = vunpack.c.l.b16 %v109
    %v1540 = vunpack.c.l.b16 %v110
    %v1541 = vunpack.c.l.b16 %v111
    %v1542 = vunpack.c.l.b16 %v112
    %v1543 = vunpack.c.l.b16 %v113
    %v1544 = vunpack.c.l.b16 %v114
    %v1545 = vunpack.c.l.b16 %v115
    %v1546 = vunpack.c.l.b16 %v116
    %v1547 = vunpack.c.l.b16 %v117
    %v1548 = vunpack.c.l.b16 %v118
    %v1549 = vunpack.c.l.b16 %v119
    %v1550 = vunpack.c.l.b16 %v120
    %v1551 = vunpack.c.l.b16 %v121
    %v1552 = vunpack.c.l.b16 %v122
    %v1553 = vunpack.c.l.b16 %v123
    %v1554 = vunpack.c.l.b16 %v124
    %v1555 = vunpack.c.l.b16 %v125
    %v1556 = vunpack.c.l.b16 %v126
    %v1557 = vunpack.c.l.b16 %v127
    %v1558 = vunpack.c.l.b16 %v128
    %v1559 = vunpack.c.l.b16 %v129
    %v1560 = vunpack.c.l.b16 %v130
    %v1561 = vunpack.c.l.b16 %v131
    %v1562 = vunpack.c.l.b16 %v132
    %v1563 = vunpack.c.l.b16 %v133
    %v1564 = vunpack.c.l.b16 %v134
    %v1565 = vunpack.c.l.b16 %v135
    %v1566 = vunpack.c.l.b16 %v136
    %v1567 = vunpack.c.l.b16 %v137
    %v1568 = vunpack.c.l.b16 %v138
    %v1569 = vunpack.c.l.b16 %v139
    %v1570 = vunpack.c.l.b16 %v140
    %v1571 = vunpack.c.l.b16 %v141
    %v1572 = vunpack.c.l.b16 %v142
    %v1573 = vunpack.c.l.b16 %v143
    %v1574 = vunpack.c.l.b16 %v144
    %v1575 = vunpack.c.l.b16 %v145
    %v1576 = vpack.c.b16 %v1513, %v1512
    %v1577 = vpack.c.b16 %v1515, %v1514
    %v1578 = vpack.c.b16 %v1517, %v1516
    %v1579 = vpack.c.b16 %v1519, %v1518
    %v1580 = vpack.c.b16 %v1521, %v1520
    %v1581 = vpack.c.b16 %v1523, %v1522
    %v1582 = vpack.c.b16 %v1525, %v1524
    %v1583 = vpack.c.b16 %v1527, %v1526
    %v1584 = vpack.c.b16 %v1529, %v1528
    %v1585 = vpack.c.b16 %v1531, %v1530
    %v1586 = vpack.c.b16 %v1533, %v1532
    %v1587 = vpack.c.b16 %v1535, %v1534
    %v1588 = vpack.c.b16 %v1537, %v1536
    %v1589 = vpack.c.b16 %v1539, %v1538
    %v1590 = vpack.c.b16 %v1541, %v1540
    %v1591 = vpack.c.b16 %v1543, %v1542
    %v1592 = vpack.c.b16 %v1545, %v1544
    %v1593 = vpack.c.b16 %v1547, %v1546
    %v1594 = vpack.c.b16 %v1549, %v1548
    %v1595 = vpack.c.b16 %v1551, %v1550
    %v1596 = vpack.c.b16 %v1553, %v1552
    %v1597 = vpack.c.b16 %v1555, %v1554
    %v1598 = vpack.c.b16 %v1557, %v1556
    %v1599 = vpack.c.b16 %v1559, %v1558
    %v1600 = vpack.c.b16 %v1561, %v1560
    %v1601 = vpack.c.b16 %v1563, %v1562
    %v1602 = vpack.c.b16 %v1565, %v1564
    %v1603 = vpack.c.b16 %v1567, %v1566
    %v1604 = vpack.c.b16 %v1569, %v1568
    %v1605 = vpack.c.b16 %v1571, %v1570
    %v1606 = vpack.c.b16 %v1573, %v1572
    %v1607 = vpack.c.b16 %v1575, %v1574
    %1640 = vmatprep.subr.bf16.mxu0 0
    %1641 = vmatpush1.bf16.msra.mxu0 %v1576
    %1642 = vmatprep.subr.bf16.mxu0 0
    %1643 = vmatpush1.bf16.msra.mxu0 %v1577
    %1644 = vmatprep.subr.bf16.mxu0 0
    %1645 = vmatpush1.bf16.msra.mxu0 %v1578
    %1646 = vmatprep.subr.bf16.mxu0 0
    %1647 = vmatpush1.bf16.msra.mxu0 %v1579
    %1648 = vmatprep.subr.bf16.mxu0 0
    %1649 = vmatpush1.bf16.msra.mxu0 %v1580
    %1650 = vmatprep.subr.bf16.mxu0 0
    %1651 = vmatpush1.bf16.msra.mxu0 %v1581
    %1652 = vmatprep.subr.bf16.mxu0 0
    %1653 = vmatpush1.bf16.msra.mxu0 %v1582
    %1654 = vmatprep.subr.bf16.mxu0 0
    %1655 = vmatpush1.bf16.msra.mxu0 %v1583
    %1656 = vmatprep.subr.bf16.mxu0 0
    %1657 = vmatpush1.bf16.msra.mxu0 %v1584
    %1658 = vmatprep.subr.bf16.mxu0 0
    %1659 = vmatpush1.bf16.msra.mxu0 %v1585
    %1660 = vmatprep.subr.bf16.mxu0 0
    %1661 = vmatpush1.bf16.msra.mxu0 %v1586
    %1662 = vmatprep.subr.bf16.mxu0 0
    %1663 = vmatpush1.bf16.msra.mxu0 %v1587
    %1664 = vmatprep.subr.bf16.mxu0 0
    %1665 = vmatpush1.bf16.msra.mxu0 %v1588
    %1666 = vmatprep.subr.bf16.mxu0 0
    %1667 = vmatpush1.bf16.msra.mxu0 %v1589
    %1668 = vmatprep.subr.bf16.mxu0 0
    %1669 = vmatpush1.bf16.msra.mxu0 %v1590
    %1670 = vmatprep.subr.bf16.mxu0 0
    %1671 = vmatpush1.bf16.msra.mxu0 %v1591
    %1672 = vmatprep.mubr.bf16.mxu0 %v1441
    %1673 = vmatmul.mubr.bf16.gmra.mrb[0].mxu0 %v1440
    %v1674 = vpop.f32.mrb[0].mxu0
    %v1675 = vadd.f32 %v1429, %v1674
    %v1676 = vpop.f32.mrb[0].mxu0
    %v1677 = vpop.f32.mrb[0].mxu0
    %v1678 = vpop.f32.mrb[0].mxu0
    %1679 = vdwg.mxu0
    %1680 = vmatprep.subr.bf16.mxu0 0
    %1681 = vmatpush1.bf16.msra.mxu0 %v1592
    %1682 = vmatprep.subr.bf16.mxu0 0
    %1683 = vmatpush1.bf16.msra.mxu0 %v1593
    %1684 = vmatprep.subr.bf16.mxu0 0
    %1685 = vmatpush1.bf16.msra.mxu0 %v1594
    %1686 = vmatprep.subr.bf16.mxu0 0
    %1687 = vmatpush1.bf16.msra.mxu0 %v1595
    %1688 = vmatprep.subr.bf16.mxu0 0
    %1689 = vmatpush1.bf16.msra.mxu0 %v1596
    %1690 = vmatprep.subr.bf16.mxu0 0
    %1691 = vmatpush1.bf16.msra.mxu0 %v1597
    %1692 = vmatprep.subr.bf16.mxu0 0
    %1693 = vmatpush1.bf16.msra.mxu0 %v1598
    %1694 = vmatprep.subr.bf16.mxu0 0
    %1695 = vmatpush1.bf16.msra.mxu0 %v1599
    %1696 = vmatprep.subr.bf16.mxu0 0
    %1697 = vmatpush1.bf16.msra.mxu0 %v1600
    %1698 = vmatprep.subr.bf16.mxu0 0
    %1699 = vmatpush1.bf16.msra.mxu0 %v1601
    %1700 = vmatprep.subr.bf16.mxu0 0
    %1701 = vmatpush1.bf16.msra.mxu0 %v1602
    %1702 = vmatprep.subr.bf16.mxu0 0
    %1703 = vmatpush1.bf16.msra.mxu0 %v1603
    %1704 = vmatprep.subr.bf16.mxu0 0
    %1705 = vmatpush1.bf16.msra.mxu0 %v1604
    %1706 = vmatprep.subr.bf16.mxu0 0
    %1707 = vmatpush1.bf16.msra.mxu0 %v1605
    %1708 = vmatprep.subr.bf16.mxu0 0
    %1709 = vmatpush1.bf16.msra.mxu0 %v1606
    %1710 = vmatprep.subr.bf16.mxu0 0
    %1711 = vmatpush1.bf16.msra.mxu0 %v1607
    %1712 = vmatprep.mubr.bf16.mxu0 %v1443
    %1713 = vmatmul.mubr.bf16.gmra.mrb[0].mxu0 %v1442
    %v1714 = vpop.f32.mrb[0].mxu0
    %v1715 = vadd.f32 %v1675, %v1714
    %v1716 = vpop.f32.mrb[0].mxu0
    %v1717 = vpop.f32.mrb[0].mxu0
    %v1718 = vpop.f32.mrb[0].mxu0
    %1719 = vdwg.mxu0
    %v1720 = vld [vmem:[%s4] sm:$0x1]
    %v1722 = vlaneseq
    %v1723 = vshrl.u32 %v1722, 7
    %v1724 = vsub.s32 0, %v1723
    %v1725 = vrot.slane %v1720, %v1724
    %v1727 = vadd.f32 %v1715, %v1725
    %v1728 = vmax.f32 %v1727, 0.0
    %v1729 = vld [vmem:[%s5] sm:$0x1]
    %v1731 = vlaneseq
    %v1732 = vshrl.u32 %v1731, 7
    %v1733 = vsub.s32 0, %v1732
    %v1734 = vrot.slane %v1729, %v1733
    %v1736 = vmul.f32 %v1728, %v1734
    %1737 = vadd.xlane.f32.xlu0 %v1736
    %v1738 = vpop.xlane.xlu0 %1737
    %s1739 = sld [smem:[#allocation2]]
    %v1740 = vstv %s1739
    %v1741 = vadd.f32 %v1738, %v1740
    %1742 = vst [vmem:[#allocation11] sm:$0xff] %v1741
    // Predicated region
    $region46: #{tpu_custom_call.1} parent=1 // pred_check
      _
    $region47: #{tpu_custom_call.1} parent=1 // pred_check_branch
      %1744 = sbr.rel (0) target = $region49
    $region48: #{tpu_custom_call.1} parent=1 // pred_region
      %s1746 = ssub.s32 128, 128
      %1747 = vsyncadd [#allocation5], %s1746
      %s1749 = sshll.u32 [#allocation11], 4
      %s1750 = int_to_ptr.vmem [resolvable:$true] %s1749
      %1752 = dma.vmem_to_hbm [thread:$0]  %s1750, 128, %s7, [#allocation5]
    $region49: #{tpu_custom_call.1} parent=1 // pred_fallthru
      _
    // Predicated region
    $region50: #{tpu_custom_call.1} parent=1 // pred_check
      _
    $region51: #{tpu_custom_call.1} parent=1 // pred_check_branch
      %1754 = sbr.rel (0) target = $region53
    $region52: #{tpu_custom_call.1} parent=1 // pred_region
      %1755 = dma.done [#allocation5], 128
    $region53: #{tpu_custom_call.1} parent=1 // pred_fallthru
      _
    %1756 = vsyncpa [#allocation4], 1
    %1757 = vsyncpa [#allocation7], 1
    %1758 = vsyncpa [#allocation10], 1
    %1759 = vsyncpa [#allocation5], 1

</llo_original>
